<compile_context>
chip_gen: v5e
topology: v5e:2x2
jax: 0.10.0
libtpu: 0.0.40
codegen_flags: <defaults>
</compile_context>

<pallas_src>
import jax
import jax.numpy as jnp
from jax.experimental import pallas as pl
from jax.experimental.pallas import tpu as pltpu

IN_DIM = 128
H1 = 1024
H2 = 256
CLASS_NUM = 16
OUT_PAD = 128                      # class_num padded to a lane-dense 128
B_TOTAL = H1 + H2 + OUT_PAD        # concatenated bias width = 1408 (11 * 128)
BN_EPS = 1e-5


def fdgc_head_kernel(x_ref, w1_ref, w2_ref, w3_ref, b_ref, o_ref):
    # ---- Linear(in_dim, 1024)  [Dropout(eval)=identity, BN1d(1024) folded] ----
    h = jnp.dot(x_ref[...], w1_ref[...], preferred_element_type=jnp.float32)
    h = h + b_ref[:, 0:H1]
    # ---- Linear(1024, 256)  [BN1d(256) folded] ----
    h = jnp.dot(h.astype(jnp.bfloat16), w2_ref[...],
                preferred_element_type=jnp.float32)
    h = h + b_ref[:, H1:H1 + H2]
    # ---- Linear(256, class_num), padded to 128 output lanes ----
    out = jnp.dot(h.astype(jnp.bfloat16), w3_ref[...],
                  preferred_element_type=jnp.float32)
    o_ref[...] = (out + b_ref[:, H1 + H2:B_TOTAL]).astype(o_ref.dtype)


def fdgc_head(x, kernel_params, tile_n=256):
    """x: (N, IN_DIM) f32.  Returns (N, CLASS_NUM) f32."""
    w1, w2, w3, b_all = kernel_params
    N = x.shape[0]

    # Row-tile: multiple of 8 sublanes, capped at tile_n; pad N up to the grid.
    n_pad = max(8, -(-N // 8) * 8)
    tile = min(tile_n, n_pad)
    n_total = -(-n_pad // tile) * tile

    xb = x.astype(jnp.bfloat16)
    if n_total != N:
        xb = jnp.pad(xb, ((0, n_total - N), (0, 0)))

    grid = (n_total // tile,)

    out = pl.pallas_call(
        fdgc_head_kernel,
        out_shape=jax.ShapeDtypeStruct((n_total, OUT_PAD), jnp.float32),
        grid_spec=pltpu.PrefetchScalarGridSpec(
            num_scalar_prefetch=0,
            grid=grid,
            in_specs=[
                pl.BlockSpec((tile, IN_DIM), lambda i: (i, 0)),     # x tile
                pl.BlockSpec((IN_DIM, H1), lambda i: (0, 0)),       # w1 (resident)
                pl.BlockSpec((H1, H2), lambda i: (0, 0)),           # w2 (resident)
                pl.BlockSpec((H2, OUT_PAD), lambda i: (0, 0)),      # w3 (resident)
                pl.BlockSpec((1, B_TOTAL), lambda i: (0, 0)),       # biases (resident)
            ],
            out_specs=pl.BlockSpec((tile, OUT_PAD), lambda i: (i, 0)),
        ),
        compiler_params=pltpu.CompilerParams(
            # Weight-DMA-bound at small N: keep one core owning the weights.
            dimension_semantics=("arbitrary",),
            vmem_limit_bytes=32 * 1024 * 1024,
        ),
    )(xb, w1, w2, w3, b_all)

    return out[:N, :CLASS_NUM]


def init_params(key):
    """Deterministic synthetic params matching the PyTorch module shapes."""
    ks = jax.random.split(key, 10)

    def linear(kw, kb, fan_in, fan_out):
        bound = 1.0 / jnp.sqrt(fan_in)
        w = jax.random.uniform(kw, (fan_in, fan_out), jnp.float32, -bound, bound)
        b = jax.random.uniform(kb, (1, fan_out), jnp.float32, -bound, bound)
        return w, b

    w1, b1 = linear(ks[0], ks[1], IN_DIM, H1)
    w2, b2 = linear(ks[2], ks[3], H1, H2)
    w3, b3 = linear(ks[4], ks[5], H2, CLASS_NUM)

    def bn(kg, kb, dim):
        gamma = 1.0 + 0.1 * jax.random.normal(kg, (1, dim), jnp.float32)
        beta = 0.1 * jax.random.normal(kb, (1, dim), jnp.float32)
        running_mean = jnp.zeros((1, dim), jnp.float32)  # PyTorch init
        running_var = jnp.ones((1, dim), jnp.float32)    # PyTorch init
        return gamma, beta, running_mean, running_var

    bn1 = bn(ks[6], ks[7], H1)
    bn2 = bn(ks[8], ks[9], H2)
    return (w1, b1, w2, b2, w3, b3, bn1, bn2)


def fold_params(params):
    """One-time transform: fold BN into adjacent Linear, pad last projection to
    128 lanes, cast weights to bf16, concatenate the per-feature biases."""
    (w1, b1, w2, b2, w3, b3, bn1, bn2) = params

    def fold(w, b, bn_p):
        gamma, beta, rm, rv = bn_p
        scale = gamma / jnp.sqrt(rv + BN_EPS)      # (1, dim)
        shift = beta - rm * scale
        return w * scale, b * scale + shift

    w1f, b1f = fold(w1, b1, bn1)
    w2f, b2f = fold(w2, b2, bn2)
    w3p = jnp.pad(w3, ((0, 0), (0, OUT_PAD - CLASS_NUM)))
    b3p = jnp.pad(b3, ((0, 0), (0, OUT_PAD - CLASS_NUM)))
    b_all = jnp.concatenate([b1f, b2f, b3p], axis=1)   # (1, 1408), f32
    return (w1f.astype(jnp.bfloat16),
            w2f.astype(jnp.bfloat16),
            w3p.astype(jnp.bfloat16),
            b_all)


def reference_matching(x, kernel_params):
    """Pure-JAX reference with the SAME bf16-weight / f32-accumulate numerics."""
    w1, w2, w3, b_all = kernel_params
    b1 = b_all[:, :H1]
    b2 = b_all[:, H1:H1 + H2]
    b3 = b_all[:, H1 + H2:]
    h = jnp.dot(x.astype(jnp.bfloat16), w1, preferred_element_type=jnp.float32) + b1
    h = jnp.dot(h.astype(jnp.bfloat16), w2, preferred_element_type=jnp.float32) + b2
    out = jnp.dot(h.astype(jnp.bfloat16), w3, preferred_element_type=jnp.float32) + b3
    return out[:, :CLASS_NUM]


def reference_f32(x, params):
    """Full-precision eval-mode forward of the original module (semantic check)."""
    (w1, b1, w2, b2, w3, b3, bn1, bn2) = params

    def bn_apply(h, bn_p):
        gamma, beta, rm, rv = bn_p
        return (h - rm) / jnp.sqrt(rv + BN_EPS) * gamma + beta

    h = x @ w1 + b1
    h = bn_apply(h, bn1)          # Dropout(0.5) = identity in eval mode
    h = h @ w2 + b2
    h = bn_apply(h, bn2)
    return h @ w3 + b3


if __name__ == "__main__":
    key = jax.random.PRNGKey(0)
    kx, kp = jax.random.split(key)

    N = 16  # small batch
    x = jax.random.normal(kx, (N, IN_DIM), jnp.float32)

    params = init_params(kp)
    kernel_params = fold_params(params)   # one-time transform

    out = fdgc_head(x, kernel_params)
    out = jax.block_until_ready(out)
    assert out.shape == (N, CLASS_NUM)

    # Exact-numerics check (same bf16 weights / f32 accumulation as kernel).
    ref_bf16 = reference_matching(x, kernel_params)
    assert jnp.allclose(out, ref_bf16, atol=2e-3, rtol=2e-3), \
        "mismatch vs bf16-matched JAX reference"

    # Semantic check vs the full-f32 eval-mode module forward (bf16 quant tolerance).
    ref_f32 = reference_f32(x, params)
    assert jnp.allclose(out, ref_f32, atol=5e-2, rtol=5e-2), \
        "mismatch vs full-precision module reference"

    print("KERNEL_OK")
</pallas_src>

<mosaic_0001>
module attributes {stable_mosaic.version = 11 : i64} {
  func.func @fdgc_head_kernel(%arg0: i32, %arg1: memref<16x128xbf16, #tpu.memory_space<vmem>>, %arg2: memref<128x1024xbf16, #tpu.memory_space<vmem>>, %arg3: memref<1024x256xbf16, #tpu.memory_space<vmem>>, %arg4: memref<256x128xbf16, #tpu.memory_space<vmem>>, %arg5: memref<1x1408xf32, #tpu.memory_space<vmem>>, %arg6: memref<16x128xf32, #tpu.memory_space<vmem>>) attributes {dimension_semantics = [#tpu.dimension_semantics<arbitrary>], iteration_bounds = array<i64: 1>, scalar_prefetch = 0 : i64, scratch_operands = 0 : i64, tpu.core_type = #tpu.core_type<tc>, window_params = [{transform_indices = @transform_0, window_bounds = array<i64: 16, 128>}, {pipeline_mode = #tpu.pipeline_mode<synchronous>, transform_indices = @transform_1, window_bounds = array<i64: 128, 1024>}, {pipeline_mode = #tpu.pipeline_mode<synchronous>, transform_indices = @transform_2, window_bounds = array<i64: 1024, 256>}, {pipeline_mode = #tpu.pipeline_mode<synchronous>, transform_indices = @transform_3, window_bounds = array<i64: 256, 128>}, {pipeline_mode = #tpu.pipeline_mode<synchronous>, transform_indices = @transform_4, window_bounds = array<i64: 1, 1408>}, {transform_indices = @transform_5, window_bounds = array<i64: 16, 128>}]} {
    %c0 = arith.constant 0 : index
    %c0_0 = arith.constant 0 : index
    %0 = vector.load %arg1[%c0, %c0_0] : memref<16x128xbf16, #tpu.memory_space<vmem>>, vector<16x128xbf16>
    %c0_1 = arith.constant 0 : index
    %c0_2 = arith.constant 0 : index
    %1 = vector.load %arg2[%c0_1, %c0_2] : memref<128x1024xbf16, #tpu.memory_space<vmem>>, vector<128x1024xbf16>
    %cst = arith.constant dense<0.000000e+00> : vector<16x1024xf32>
    %2 = tpu.matmul %0, %1, %cst {dimension_numbers = #tpu.dot_dimension_numbers<[1], [0], [0], [1], [0, 0, 1, 1], [], []>} : vector<16x128xbf16>, vector<128x1024xbf16>, vector<16x1024xf32> -> vector<16x1024xf32>
    %c0_3 = arith.constant 0 : index
    %c0_4 = arith.constant 0 : index
    %3 = vector.load %arg5[%c0_3, %c0_4] : memref<1x1408xf32, #tpu.memory_space<vmem>>, vector<1x1024xf32>
    %4 = vector.broadcast %3 : vector<1x1024xf32> to vector<16x1024xf32>
    %5 = arith.addf %2, %4 : vector<16x1024xf32>
    %6 = arith.truncf %5 : vector<16x1024xf32> to vector<16x1024xbf16>
    %c0_5 = arith.constant 0 : index
    %c0_6 = arith.constant 0 : index
    %7 = vector.load %arg3[%c0_5, %c0_6] : memref<1024x256xbf16, #tpu.memory_space<vmem>>, vector<1024x256xbf16>
    %cst_7 = arith.constant dense<0.000000e+00> : vector<16x256xf32>
    %8 = tpu.matmul %6, %7, %cst_7 {dimension_numbers = #tpu.dot_dimension_numbers<[1], [0], [0], [1], [0, 0, 1, 1], [], []>} : vector<16x1024xbf16>, vector<1024x256xbf16>, vector<16x256xf32> -> vector<16x256xf32>
    %c0_8 = arith.constant 0 : index
    %c1024 = arith.constant 1024 : index
    %9 = vector.load %arg5[%c0_8, %c1024] : memref<1x1408xf32, #tpu.memory_space<vmem>>, vector<1x256xf32>
    %10 = vector.broadcast %9 : vector<1x256xf32> to vector<16x256xf32>
    %11 = arith.addf %8, %10 : vector<16x256xf32>
    %12 = arith.truncf %11 : vector<16x256xf32> to vector<16x256xbf16>
    %c0_9 = arith.constant 0 : index
    %c0_10 = arith.constant 0 : index
    %13 = vector.load %arg4[%c0_9, %c0_10] : memref<256x128xbf16, #tpu.memory_space<vmem>>, vector<256x128xbf16>
    %cst_11 = arith.constant dense<0.000000e+00> : vector<16x128xf32>
    %14 = tpu.matmul %12, %13, %cst_11 {dimension_numbers = #tpu.dot_dimension_numbers<[1], [0], [0], [1], [0, 0, 1, 1], [], []>} : vector<16x256xbf16>, vector<256x128xbf16>, vector<16x128xf32> -> vector<16x128xf32>
    %c0_12 = arith.constant 0 : index
    %c1280 = arith.constant 1280 : index
    %15 = vector.load %arg5[%c0_12, %c1280] : memref<1x1408xf32, #tpu.memory_space<vmem>>, vector<1x128xf32>
    %16 = vector.broadcast %15 : vector<1x128xf32> to vector<16x128xf32>
    %17 = arith.addf %14, %16 : vector<16x128xf32>
    %c0_13 = arith.constant 0 : index
    %c0_14 = arith.constant 0 : index
    %18 = vector.load %arg6[%c0_13, %c0_14] : memref<16x128xf32, #tpu.memory_space<vmem>>, vector<16x128xf32>
    tpu.vector_store %arg6[%c0_13, %c0_14], %17 {strides = array<i32>} : memref<16x128xf32, #tpu.memory_space<vmem>>, vector<16x128xf32>,
    return
  }
  func.func @transform_0(%arg0: i32) -> (i32, i32) {
    %c0_i32 = arith.constant 0 : i32
    %c0_i32_0 = arith.constant 0 : i32
    return %arg0, %c0_i32 : i32, i32
  }
  func.func @transform_1(%arg0: i32) -> (i32, i32) {
    %c0_i32 = arith.constant 0 : i32
    %c0_i32_0 = arith.constant 0 : i32
    %c0_i32_1 = arith.constant 0 : i32
    return %c0_i32, %c0_i32_0 : i32, i32
  }
  func.func @transform_2(%arg0: i32) -> (i32, i32) {
    %c0_i32 = arith.constant 0 : i32
    %c0_i32_0 = arith.constant 0 : i32
    %c0_i32_1 = arith.constant 0 : i32
    return %c0_i32, %c0_i32_0 : i32, i32
  }
  func.func @transform_3(%arg0: i32) -> (i32, i32) {
    %c0_i32 = arith.constant 0 : i32
    %c0_i32_0 = arith.constant 0 : i32
    %c0_i32_1 = arith.constant 0 : i32
    return %c0_i32, %c0_i32_0 : i32, i32
  }
  func.func @transform_4(%arg0: i32) -> (i32, i32) {
    %c0_i32 = arith.constant 0 : i32
    %c0_i32_0 = arith.constant 0 : i32
    %c0_i32_1 = arith.constant 0 : i32
    return %c0_i32, %c0_i32_0 : i32, i32
  }
  func.func @transform_5(%arg0: i32) -> (i32, i32) {
    %c0_i32 = arith.constant 0 : i32
    %c0_i32_0 = arith.constant 0 : i32
    return %arg0, %c0_i32 : i32, i32
  }
}

</mosaic_0001>

<llo_original>
// kernel: tpu_custom_call.1
$region0: #{tpu_custom_call.1}
  #allocation0 [shape = 'u32[]', space=smem, size = 0x4, offset = 0x4, fixed_abs, tag = 'smem constant byte address 0x4 - core index']
  #allocation1 [shape = 'u32[72,128]{1,0:T(1,128)}', space=vmem, size = 0x9000, scoped, tag = 'internal scratch']
  %s0 = inlined_call_operand.hbm [shape: bf16[16,128], index: 0, kind: input, shape index: {}]
  %s1 = inlined_call_operand.hbm [shape: bf16[128,1024], index: 1, kind: input, shape index: {}]
  %s2 = inlined_call_operand.hbm [shape: bf16[1024,256], index: 2, kind: input, shape index: {}]
  %s3 = inlined_call_operand.hbm [shape: bf16[256,128], index: 3, kind: input, shape index: {}]
  %s4 = inlined_call_operand.hbm [shape: f32[1,1408], index: 4, kind: input, shape index: {}]
  %s5 = inlined_call_operand.hbm [shape: f32[16,128], index: 5, kind: output, shape index: {}]
  %s6 = sld [smem:[#allocation0]]
  $region50: #{tpu_custom_call.1} parent=0
    _
  %s8 = ssub.s32 1, %s6
  %s9 = scalar_select 0, %s8, %s6
  $region1: #{tpu_custom_call.1} parent=0
    #allocation2 [shape = 'u8[4096]{0}', space=vmem, size = 0x1000, scoped, tag = 'input window, operand 0, single buffered']
    #allocation3 [shape = 's32[1]{0}', space=sflag, size = 0x4, scoped, tag = 'scoped memory for tpu_custom_call.1']
    #allocation4 [shape = 's32[1]{0}', space=sflag, size = 0x4, scoped, tag = 'scoped memory for tpu_custom_call.1']
    #allocation5 [shape = 'u8[262144]{0}', space=vmem, size = 0x40000, scoped, tag = 'input window, operand 1, single buffered']
    #allocation6 [shape = 's32[1]{0}', space=sflag, size = 0x4, scoped, tag = 'scoped memory for tpu_custom_call.1']
    #allocation7 [shape = 'u8[524288]{0}', space=vmem, size = 0x80000, scoped, tag = 'input window, operand 2, single buffered']
    #allocation8 [shape = 'u8[65536]{0}', space=vmem, size = 0x10000, scoped, tag = 'input window, operand 3, single buffered']
    #allocation9 [shape = 's32[1]{0}', space=sflag, size = 0x4, scoped, tag = 'scoped memory for tpu_custom_call.1']
    #allocation10 [shape = 'u8[5632]{0}', space=vmem, size = 0x1800, scoped, tag = 'input window, operand 4, single buffered']
    #allocation11 [shape = 'u8[8192]{0}', space=vmem, size = 0x2000, scoped, tag = 'output window, operand 0, single buffered']
    %10 = vsyncpa [#allocation3], 0
    %11 = vsyncpa [#allocation6], 0
    %12 = vsyncpa [#allocation9], 0
    %13 = vsyncpa [#allocation4], 0
    // Predicated region
    $region2: #{tpu_custom_call.1} parent=1 // pred_check
      _
    $region3: #{tpu_custom_call.1} parent=1 // pred_check_branch
      %15 = sbr.rel (0) target = $region5
    $region4: #{tpu_custom_call.1} parent=1 // pred_region
      %17 = vsyncadd [#allocation3], 0
      %s18 = sshll.u32 %s0, 4
      %s19 = int_to_ptr.hbm [resolvable:$true] %s18
      %s20 = sshll.u32 [#allocation2], 4
      %s21 = int_to_ptr.vmem [resolvable:$true] %s20
      %26 = dma.hbm_to_vmem [thread:$0]  %s19, 128, %s21, [#allocation3], 64, 64, 4
    $region5: #{tpu_custom_call.1} parent=1 // pred_fallthru
      _
    // Predicated region
    $region6: #{tpu_custom_call.1} parent=1 // pred_check
      _
    $region7: #{tpu_custom_call.1} parent=1 // pred_check_branch
      %28 = sbr.rel (0) target = $region9
    $region8: #{tpu_custom_call.1} parent=1 // pred_region
      %30 = vsyncadd [#allocation6], 0
      %s31 = sshll.u32 %s1, 4
      %s32 = int_to_ptr.hbm [resolvable:$true] %s31
      %s33 = sshll.u32 [#allocation5], 4
      %s34 = int_to_ptr.vmem [resolvable:$true] %s33
      %39 = dma.hbm_to_vmem [thread:$0]  %s32, 8192, %s34, [#allocation6], 512, 512, 32
    $region9: #{tpu_custom_call.1} parent=1 // pred_fallthru
      _
    // Predicated region
    $region10: #{tpu_custom_call.1} parent=1 // pred_check
      _
    $region11: #{tpu_custom_call.1} parent=1 // pred_check_branch
      %41 = sbr.rel (0) target = $region13
    $region12: #{tpu_custom_call.1} parent=1 // pred_region
      %43 = vsyncadd [#allocation6], 0
      %s44 = sshll.u32 %s2, 4
      %s45 = int_to_ptr.hbm [resolvable:$true] %s44
      %s46 = sshll.u32 [#allocation7], 4
      %s47 = int_to_ptr.vmem [resolvable:$true] %s46
      %52 = dma.hbm_to_vmem [thread:$0]  %s45, 16384, %s47, [#allocation6], 128, 128, 8
    $region13: #{tpu_custom_call.1} parent=1 // pred_fallthru
      _
    // Predicated region
    $region14: #{tpu_custom_call.1} parent=1 // pred_check
      _
    $region15: #{tpu_custom_call.1} parent=1 // pred_check_branch
      %54 = sbr.rel (0) target = $region17
    $region16: #{tpu_custom_call.1} parent=1 // pred_region
      %56 = vsyncadd [#allocation9], 0
      %s57 = sshll.u32 %s3, 4
      %s58 = int_to_ptr.hbm [resolvable:$true] %s57
      %s59 = sshll.u32 [#allocation8], 4
      %s60 = int_to_ptr.vmem [resolvable:$true] %s59
      %65 = dma.hbm_to_vmem [thread:$0]  %s58, 2048, %s60, [#allocation9], 64, 64, 4
    $region17: #{tpu_custom_call.1} parent=1 // pred_fallthru
      _
    // Predicated region
    $region18: #{tpu_custom_call.1} parent=1 // pred_check
      _
    $region19: #{tpu_custom_call.1} parent=1 // pred_check_branch
      %67 = sbr.rel (0) target = $region21
    $region20: #{tpu_custom_call.1} parent=1 // pred_region
      %69 = vsyncadd [#allocation9], 0
      %s71 = sshll.u32 %s4, 4
      %s72 = int_to_ptr.hbm [resolvable:$true] %s71
      %s73 = sshll.u32 [#allocation10], 4
      %s74 = int_to_ptr.vmem [resolvable:$true] %s73
      %76 = dma.hbm_to_vmem [thread:$0]  %s72, 176, %s74, [#allocation9]
    $region21: #{tpu_custom_call.1} parent=1 // pred_fallthru
      _
    // Predicated region
    $region22: #{tpu_custom_call.1} parent=1 // pred_check
      _
    $region23: #{tpu_custom_call.1} parent=1 // pred_check_branch
      %78 = sbr.rel (0) target = $region25
    $region24: #{tpu_custom_call.1} parent=1 // pred_region
      %80 = dma.done [#allocation3], 128
    $region25: #{tpu_custom_call.1} parent=1 // pred_fallthru
      _
    // Predicated region
    $region26: #{tpu_custom_call.1} parent=1 // pred_check
      _
    $region27: #{tpu_custom_call.1} parent=1 // pred_check_branch
      %82 = sbr.rel (0) target = $region29
    $region28: #{tpu_custom_call.1} parent=1 // pred_region
      %84 = dma.done [#allocation6], 8192
    $region29: #{tpu_custom_call.1} parent=1 // pred_fallthru
      _
    // Predicated region
    $region30: #{tpu_custom_call.1} parent=1 // pred_check
      _
    $region31: #{tpu_custom_call.1} parent=1 // pred_check_branch
      %86 = sbr.rel (0) target = $region33
    $region32: #{tpu_custom_call.1} parent=1 // pred_region
      %88 = dma.done [#allocation6], 16384
    $region33: #{tpu_custom_call.1} parent=1 // pred_fallthru
      _
    // Predicated region
    $region34: #{tpu_custom_call.1} parent=1 // pred_check
      _
    $region35: #{tpu_custom_call.1} parent=1 // pred_check_branch
      %90 = sbr.rel (0) target = $region37
    $region36: #{tpu_custom_call.1} parent=1 // pred_region
      %92 = dma.done [#allocation9], 2048
    $region37: #{tpu_custom_call.1} parent=1 // pred_fallthru
      _
    // Predicated region
    $region38: #{tpu_custom_call.1} parent=1 // pred_check
      _
    $region39: #{tpu_custom_call.1} parent=1 // pred_check_branch
      %94 = sbr.rel (0) target = $region41
    $region40: #{tpu_custom_call.1} parent=1 // pred_region
      %96 = dma.done [#allocation9], 176
    $region41: #{tpu_custom_call.1} parent=1 // pred_fallthru
      _
    %v97 = vld [vmem:[#allocation2] sm:$0xf]
    %v98 = vld [vmem:[#allocation2 + $0x4] sm:$0xf]
    %v99 = vld [vmem:[#allocation5] sm:$0xff]
    %v100 = vld [vmem:[#allocation5 + $0x8] sm:$0xff]
    %v101 = vld [vmem:[#allocation5 + $0x10] sm:$0xff]
    %v102 = vld [vmem:[#allocation5 + $0x18] sm:$0xff]
    %v103 = vld [vmem:[#allocation5 + $0x20] sm:$0xff]
    %v104 = vld [vmem:[#allocation5 + $0x28] sm:$0xff]
    %v105 = vld [vmem:[#allocation5 + $0x30] sm:$0xff]
    %v106 = vld [vmem:[#allocation5 + $0x38] sm:$0xff]
    %v107 = vld [vmem:[#allocation5 + $0x40] sm:$0xff]
    %v108 = vld [vmem:[#allocation5 + $0x48] sm:$0xff]
    %v109 = vld [vmem:[#allocation5 + $0x50] sm:$0xff]
    %v110 = vld [vmem:[#allocation5 + $0x58] sm:$0xff]
    %v111 = vld [vmem:[#allocation5 + $0x60] sm:$0xff]
    %v112 = vld [vmem:[#allocation5 + $0x68] sm:$0xff]
    %v113 = vld [vmem:[#allocation5 + $0x70] sm:$0xff]
    %v114 = vld [vmem:[#allocation5 + $0x78] sm:$0xff]
    %v115 = vld [vmem:[#allocation5 + $0x80] sm:$0xff]
    %v116 = vld [vmem:[#allocation5 + $0x88] sm:$0xff]
    %v117 = vld [vmem:[#allocation5 + $0x90] sm:$0xff]
    %v118 = vld [vmem:[#allocation5 + $0x98] sm:$0xff]
    %v119 = vld [vmem:[#allocation5 + $0xa0] sm:$0xff]
    %v120 = vld [vmem:[#allocation5 + $0xa8] sm:$0xff]
    %v121 = vld [vmem:[#allocation5 + $0xb0] sm:$0xff]
    %v122 = vld [vmem:[#allocation5 + $0xb8] sm:$0xff]
    %v123 = vld [vmem:[#allocation5 + $0xc0] sm:$0xff]
    %v124 = vld [vmem:[#allocation5 + $0xc8] sm:$0xff]
    %v125 = vld [vmem:[#allocation5 + $0xd0] sm:$0xff]
    %v126 = vld [vmem:[#allocation5 + $0xd8] sm:$0xff]
    %v127 = vld [vmem:[#allocation5 + $0xe0] sm:$0xff]
    %v128 = vld [vmem:[#allocation5 + $0xe8] sm:$0xff]
    %v129 = vld [vmem:[#allocation5 + $0xf0] sm:$0xff]
    %v130 = vld [vmem:[#allocation5 + $0xf8] sm:$0xff]
    %v131 = vld [vmem:[#allocation5 + $0x100] sm:$0xff]
    %v132 = vld [vmem:[#allocation5 + $0x108] sm:$0xff]
    %v133 = vld [vmem:[#allocation5 + $0x110] sm:$0xff]
    %v134 = vld [vmem:[#allocation5 + $0x118] sm:$0xff]
    %v135 = vld [vmem:[#allocation5 + $0x120] sm:$0xff]
    %v136 = vld [vmem:[#allocation5 + $0x128] sm:$0xff]
    %v137 = vld [vmem:[#allocation5 + $0x130] sm:$0xff]
    %v138 = vld [vmem:[#allocation5 + $0x138] sm:$0xff]
    %v139 = vld [vmem:[#allocation5 + $0x140] sm:$0xff]
    %v140 = vld [vmem:[#allocation5 + $0x148] sm:$0xff]
    %v141 = vld [vmem:[#allocation5 + $0x150] sm:$0xff]
    %v142 = vld [vmem:[#allocation5 + $0x158] sm:$0xff]
    %v143 = vld [vmem:[#allocation5 + $0x160] sm:$0xff]
    %v144 = vld [vmem:[#allocation5 + $0x168] sm:$0xff]
    %v145 = vld [vmem:[#allocation5 + $0x170] sm:$0xff]
    %v146 = vld [vmem:[#allocation5 + $0x178] sm:$0xff]
    %v147 = vld [vmem:[#allocation5 + $0x180] sm:$0xff]
    %v148 = vld [vmem:[#allocation5 + $0x188] sm:$0xff]
    %v149 = vld [vmem:[#allocation5 + $0x190] sm:$0xff]
    %v150 = vld [vmem:[#allocation5 + $0x198] sm:$0xff]
    %v151 = vld [vmem:[#allocation5 + $0x1a0] sm:$0xff]
    %v152 = vld [vmem:[#allocation5 + $0x1a8] sm:$0xff]
    %v153 = vld [vmem:[#allocation5 + $0x1b0] sm:$0xff]
    %v154 = vld [vmem:[#allocation5 + $0x1b8] sm:$0xff]
    %v155 = vld [vmem:[#allocation5 + $0x1c0] sm:$0xff]
    %v156 = vld [vmem:[#allocation5 + $0x1c8] sm:$0xff]
    %v157 = vld [vmem:[#allocation5 + $0x1d0] sm:$0xff]
    %v158 = vld [vmem:[#allocation5 + $0x1d8] sm:$0xff]
    %v159 = vld [vmem:[#allocation5 + $0x1e0] sm:$0xff]
    %v160 = vld [vmem:[#allocation5 + $0x1e8] sm:$0xff]
    %v161 = vld [vmem:[#allocation5 + $0x1f0] sm:$0xff]
    %v162 = vld [vmem:[#allocation5 + $0x1f8] sm:$0xff]
    %v163 = vld [vmem:[#allocation10] sm:$0xff]
    %v165 = vperm.slane %v163, 0
    %v166 = vperm.slane %v163, 1
    %v167 = vperm.slane %v163, 2
    %v168 = vperm.slane %v163, 3
    %v169 = vperm.slane %v163, 4
    %v170 = vperm.slane %v163, 5
    %v171 = vperm.slane %v163, 6
    %v172 = vperm.slane %v163, 7
    %v183 = vunpack.c.l.b16 %v97
    %v184 = vunpack.c.l.b16 %v98
    %v185 = vpack.c.b16 %v184, %v183
    %v251 = vunpack.c.l.b16 %v99
    %v252 = vunpack.c.h.b16 %v99
    %v253 = vunpack.c.l.b16 %v100
    %v254 = vunpack.c.h.b16 %v100
    %v255 = vunpack.c.l.b16 %v101
    %v256 = vunpack.c.h.b16 %v101
    %v257 = vunpack.c.l.b16 %v102
    %v258 = vunpack.c.h.b16 %v102
    %v259 = vunpack.c.l.b16 %v103
    %v260 = vunpack.c.h.b16 %v103
    %v261 = vunpack.c.l.b16 %v104
    %v262 = vunpack.c.h.b16 %v104
    %v263 = vunpack.c.l.b16 %v105
    %v264 = vunpack.c.h.b16 %v105
    %v265 = vunpack.c.l.b16 %v106
    %v266 = vunpack.c.h.b16 %v106
    %v267 = vunpack.c.l.b16 %v107
    %v268 = vunpack.c.h.b16 %v107
    %v269 = vunpack.c.l.b16 %v108
    %v270 = vunpack.c.h.b16 %v108
    %v271 = vunpack.c.l.b16 %v109
    %v272 = vunpack.c.h.b16 %v109
    %v273 = vunpack.c.l.b16 %v110
    %v274 = vunpack.c.h.b16 %v110
    %v275 = vunpack.c.l.b16 %v111
    %v276 = vunpack.c.h.b16 %v111
    %v277 = vunpack.c.l.b16 %v112
    %v278 = vunpack.c.h.b16 %v112
    %v279 = vunpack.c.l.b16 %v113
    %v280 = vunpack.c.h.b16 %v113
    %v281 = vunpack.c.l.b16 %v114
    %v282 = vunpack.c.h.b16 %v114
    %v283 = vunpack.c.l.b16 %v115
    %v284 = vunpack.c.h.b16 %v115
    %v285 = vunpack.c.l.b16 %v116
    %v286 = vunpack.c.h.b16 %v116
    %v287 = vunpack.c.l.b16 %v117
    %v288 = vunpack.c.h.b16 %v117
    %v289 = vunpack.c.l.b16 %v118
    %v290 = vunpack.c.h.b16 %v118
    %v291 = vunpack.c.l.b16 %v119
    %v292 = vunpack.c.h.b16 %v119
    %v293 = vunpack.c.l.b16 %v120
    %v294 = vunpack.c.h.b16 %v120
    %v295 = vunpack.c.l.b16 %v121
    %v296 = vunpack.c.h.b16 %v121
    %v297 = vunpack.c.l.b16 %v122
    %v298 = vunpack.c.h.b16 %v122
    %v299 = vunpack.c.l.b16 %v123
    %v300 = vunpack.c.h.b16 %v123
    %v301 = vunpack.c.l.b16 %v124
    %v302 = vunpack.c.h.b16 %v124
    %v303 = vunpack.c.l.b16 %v125
    %v304 = vunpack.c.h.b16 %v125
    %v305 = vunpack.c.l.b16 %v126
    %v306 = vunpack.c.h.b16 %v126
    %v307 = vunpack.c.l.b16 %v127
    %v308 = vunpack.c.h.b16 %v127
    %v309 = vunpack.c.l.b16 %v128
    %v310 = vunpack.c.h.b16 %v128
    %v311 = vunpack.c.l.b16 %v129
    %v312 = vunpack.c.h.b16 %v129
    %v313 = vunpack.c.l.b16 %v130
    %v314 = vunpack.c.h.b16 %v130
    %v315 = vunpack.c.l.b16 %v131
    %v316 = vunpack.c.h.b16 %v131
    %v317 = vunpack.c.l.b16 %v132
    %v318 = vunpack.c.h.b16 %v132
    %v319 = vunpack.c.l.b16 %v133
    %v320 = vunpack.c.h.b16 %v133
    %v321 = vunpack.c.l.b16 %v134
    %v322 = vunpack.c.h.b16 %v134
    %v323 = vunpack.c.l.b16 %v135
    %v324 = vunpack.c.h.b16 %v135
    %v325 = vunpack.c.l.b16 %v136
    %v326 = vunpack.c.h.b16 %v136
    %v327 = vunpack.c.l.b16 %v137
    %v328 = vunpack.c.h.b16 %v137
    %v329 = vunpack.c.l.b16 %v138
    %v330 = vunpack.c.h.b16 %v138
    %v331 = vunpack.c.l.b16 %v139
    %v332 = vunpack.c.h.b16 %v139
    %v333 = vunpack.c.l.b16 %v140
    %v334 = vunpack.c.h.b16 %v140
    %v335 = vunpack.c.l.b16 %v141
    %v336 = vunpack.c.h.b16 %v141
    %v337 = vunpack.c.l.b16 %v142
    %v338 = vunpack.c.h.b16 %v142
    %v339 = vunpack.c.l.b16 %v143
    %v340 = vunpack.c.h.b16 %v143
    %v341 = vunpack.c.l.b16 %v144
    %v342 = vunpack.c.h.b16 %v144
    %v343 = vunpack.c.l.b16 %v145
    %v344 = vunpack.c.h.b16 %v145
    %v345 = vunpack.c.l.b16 %v146
    %v346 = vunpack.c.h.b16 %v146
    %v347 = vunpack.c.l.b16 %v147
    %v348 = vunpack.c.h.b16 %v147
    %v349 = vunpack.c.l.b16 %v148
    %v350 = vunpack.c.h.b16 %v148
    %v351 = vunpack.c.l.b16 %v149
    %v352 = vunpack.c.h.b16 %v149
    %v353 = vunpack.c.l.b16 %v150
    %v354 = vunpack.c.h.b16 %v150
    %v355 = vunpack.c.l.b16 %v151
    %v356 = vunpack.c.h.b16 %v151
    %v357 = vunpack.c.l.b16 %v152
    %v358 = vunpack.c.h.b16 %v152
    %v359 = vunpack.c.l.b16 %v153
    %v360 = vunpack.c.h.b16 %v153
    %v361 = vunpack.c.l.b16 %v154
    %v362 = vunpack.c.h.b16 %v154
    %v363 = vunpack.c.l.b16 %v155
    %v364 = vunpack.c.h.b16 %v155
    %v365 = vunpack.c.l.b16 %v156
    %v366 = vunpack.c.h.b16 %v156
    %v367 = vunpack.c.l.b16 %v157
    %v368 = vunpack.c.h.b16 %v157
    %v369 = vunpack.c.l.b16 %v158
    %v370 = vunpack.c.h.b16 %v158
    %v371 = vunpack.c.l.b16 %v159
    %v372 = vunpack.c.h.b16 %v159
    %v373 = vunpack.c.l.b16 %v160
    %v374 = vunpack.c.h.b16 %v160
    %v375 = vunpack.c.l.b16 %v161
    %v376 = vunpack.c.h.b16 %v161
    %v377 = vunpack.c.l.b16 %v162
    %v378 = vunpack.c.h.b16 %v162
    %v379 = vpack.c.b16 %v259, %v251
    %v380 = vpack.c.b16 %v260, %v252
    %v381 = vpack.c.b16 %v261, %v253
    %v382 = vpack.c.b16 %v262, %v254
    %v383 = vpack.c.b16 %v263, %v255
    %v384 = vpack.c.b16 %v264, %v256
    %v385 = vpack.c.b16 %v265, %v257
    %v386 = vpack.c.b16 %v266, %v258
    %v387 = vpack.c.b16 %v275, %v267
    %v388 = vpack.c.b16 %v276, %v268
    %v389 = vpack.c.b16 %v277, %v269
    %v390 = vpack.c.b16 %v278, %v270
    %v391 = vpack.c.b16 %v279, %v271
    %v392 = vpack.c.b16 %v280, %v272
    %v393 = vpack.c.b16 %v281, %v273
    %v394 = vpack.c.b16 %v282, %v274
    %v395 = vpack.c.b16 %v291, %v283
    %v396 = vpack.c.b16 %v292, %v284
    %v397 = vpack.c.b16 %v293, %v285
    %v398 = vpack.c.b16 %v294, %v286
    %v399 = vpack.c.b16 %v295, %v287
    %v400 = vpack.c.b16 %v296, %v288
    %v401 = vpack.c.b16 %v297, %v289
    %v402 = vpack.c.b16 %v298, %v290
    %v403 = vpack.c.b16 %v307, %v299
    %v404 = vpack.c.b16 %v308, %v300
    %v405 = vpack.c.b16 %v309, %v301
    %v406 = vpack.c.b16 %v310, %v302
    %v407 = vpack.c.b16 %v311, %v303
    %v408 = vpack.c.b16 %v312, %v304
    %v409 = vpack.c.b16 %v313, %v305
    %v410 = vpack.c.b16 %v314, %v306
    %v411 = vpack.c.b16 %v323, %v315
    %v412 = vpack.c.b16 %v324, %v316
    %v413 = vpack.c.b16 %v325, %v317
    %v414 = vpack.c.b16 %v326, %v318
    %v415 = vpack.c.b16 %v327, %v319
    %v416 = vpack.c.b16 %v328, %v320
    %v417 = vpack.c.b16 %v329, %v321
    %v418 = vpack.c.b16 %v330, %v322
    %v419 = vpack.c.b16 %v339, %v331
    %v420 = vpack.c.b16 %v340, %v332
    %v421 = vpack.c.b16 %v341, %v333
    %v422 = vpack.c.b16 %v342, %v334
    %v423 = vpack.c.b16 %v343, %v335
    %v424 = vpack.c.b16 %v344, %v336
    %v425 = vpack.c.b16 %v345, %v337
    %v426 = vpack.c.b16 %v346, %v338
    %v427 = vpack.c.b16 %v355, %v347
    %v428 = vpack.c.b16 %v356, %v348
    %v429 = vpack.c.b16 %v357, %v349
    %v430 = vpack.c.b16 %v358, %v350
    %v431 = vpack.c.b16 %v359, %v351
    %v432 = vpack.c.b16 %v360, %v352
    %v433 = vpack.c.b16 %v361, %v353
    %v434 = vpack.c.b16 %v362, %v354
    %v435 = vpack.c.b16 %v371, %v363
    %v436 = vpack.c.b16 %v372, %v364
    %v437 = vpack.c.b16 %v373, %v365
    %v438 = vpack.c.b16 %v374, %v366
    %v439 = vpack.c.b16 %v375, %v367
    %v440 = vpack.c.b16 %v376, %v368
    %v441 = vpack.c.b16 %v377, %v369
    %v442 = vpack.c.b16 %v378, %v370
    %507 = vmatpush.bf16.msra.mxu0 %v435
    %508 = vmatpush.bf16.msra.mxu0 %v427
    %509 = vmatpush.bf16.msra.mxu0 %v419
    %510 = vmatpush.bf16.msra.mxu0 %v411
    %511 = vmatpush.bf16.msra.mxu0 %v403
    %512 = vmatpush.bf16.msra.mxu0 %v395
    %513 = vmatpush.bf16.msra.mxu0 %v387
    %514 = vmatpush.bf16.msra.mxu0 %v379
    %515 = vmatmul.bf16.gmra.mxu0 %v185
    %v516 = vpop.f32.mrf.mxu0
    %v517 = vadd.f32 %v165, %v516
    %v518 = vpop.f32.mrf.mxu0
    %v519 = vadd.f32 %v165, %v518
    %520 = vdwg.mxu0
    %521 = vmatpush.bf16.msra.mxu0 %v436
    %522 = vmatpush.bf16.msra.mxu0 %v428
    %523 = vmatpush.bf16.msra.mxu0 %v420
    %524 = vmatpush.bf16.msra.mxu0 %v412
    %525 = vmatpush.bf16.msra.mxu0 %v404
    %526 = vmatpush.bf16.msra.mxu0 %v396
    %527 = vmatpush.bf16.msra.mxu0 %v388
    %528 = vmatpush.bf16.msra.mxu0 %v380
    %529 = vmatmul.bf16.gmra.mxu0 %v185
    %v530 = vpop.f32.mrf.mxu0
    %v531 = vadd.f32 %v166, %v530
    %v532 = vpop.f32.mrf.mxu0
    %v533 = vadd.f32 %v166, %v532
    %534 = vdwg.mxu0
    %535 = vmatpush.bf16.msra.mxu0 %v437
    %536 = vmatpush.bf16.msra.mxu0 %v429
    %537 = vmatpush.bf16.msra.mxu0 %v421
    %538 = vmatpush.bf16.msra.mxu0 %v413
    %539 = vmatpush.bf16.msra.mxu0 %v405
    %540 = vmatpush.bf16.msra.mxu0 %v397
    %541 = vmatpush.bf16.msra.mxu0 %v389
    %542 = vmatpush.bf16.msra.mxu0 %v381
    %543 = vmatmul.bf16.gmra.mxu0 %v185
    %v544 = vpop.f32.mrf.mxu0
    %v545 = vadd.f32 %v167, %v544
    %v546 = vpop.f32.mrf.mxu0
    %v547 = vadd.f32 %v167, %v546
    %548 = vdwg.mxu0
    %549 = vmatpush.bf16.msra.mxu0 %v438
    %550 = vmatpush.bf16.msra.mxu0 %v430
    %551 = vmatpush.bf16.msra.mxu0 %v422
    %552 = vmatpush.bf16.msra.mxu0 %v414
    %553 = vmatpush.bf16.msra.mxu0 %v406
    %554 = vmatpush.bf16.msra.mxu0 %v398
    %555 = vmatpush.bf16.msra.mxu0 %v390
    %556 = vmatpush.bf16.msra.mxu0 %v382
    %557 = vmatmul.bf16.gmra.mxu0 %v185
    %v558 = vpop.f32.mrf.mxu0
    %v559 = vadd.f32 %v168, %v558
    %v560 = vpop.f32.mrf.mxu0
    %v561 = vadd.f32 %v168, %v560
    %562 = vdwg.mxu0
    %563 = vmatpush.bf16.msra.mxu0 %v439
    %564 = vmatpush.bf16.msra.mxu0 %v431
    %565 = vmatpush.bf16.msra.mxu0 %v423
    %566 = vmatpush.bf16.msra.mxu0 %v415
    %567 = vmatpush.bf16.msra.mxu0 %v407
    %568 = vmatpush.bf16.msra.mxu0 %v399
    %569 = vmatpush.bf16.msra.mxu0 %v391
    %570 = vmatpush.bf16.msra.mxu0 %v383
    %571 = vmatmul.bf16.gmra.mxu0 %v185
    %v572 = vpop.f32.mrf.mxu0
    %v573 = vadd.f32 %v169, %v572
    %v574 = vpop.f32.mrf.mxu0
    %v575 = vadd.f32 %v169, %v574
    %576 = vdwg.mxu0
    %577 = vmatpush.bf16.msra.mxu0 %v440
    %578 = vmatpush.bf16.msra.mxu0 %v432
    %579 = vmatpush.bf16.msra.mxu0 %v424
    %580 = vmatpush.bf16.msra.mxu0 %v416
    %581 = vmatpush.bf16.msra.mxu0 %v408
    %582 = vmatpush.bf16.msra.mxu0 %v400
    %583 = vmatpush.bf16.msra.mxu0 %v392
    %584 = vmatpush.bf16.msra.mxu0 %v384
    %585 = vmatmul.bf16.gmra.mxu0 %v185
    %v586 = vpop.f32.mrf.mxu0
    %v587 = vadd.f32 %v170, %v586
    %v588 = vpop.f32.mrf.mxu0
    %v589 = vadd.f32 %v170, %v588
    %590 = vdwg.mxu0
    %591 = vmatpush.bf16.msra.mxu0 %v441
    %592 = vmatpush.bf16.msra.mxu0 %v433
    %593 = vmatpush.bf16.msra.mxu0 %v425
    %594 = vmatpush.bf16.msra.mxu0 %v417
    %595 = vmatpush.bf16.msra.mxu0 %v409
    %596 = vmatpush.bf16.msra.mxu0 %v401
    %597 = vmatpush.bf16.msra.mxu0 %v393
    %598 = vmatpush.bf16.msra.mxu0 %v385
    %599 = vmatmul.bf16.gmra.mxu0 %v185
    %v600 = vpop.f32.mrf.mxu0
    %v601 = vadd.f32 %v171, %v600
    %v602 = vpop.f32.mrf.mxu0
    %v603 = vadd.f32 %v171, %v602
    %604 = vdwg.mxu0
    %605 = vmatpush.bf16.msra.mxu0 %v442
    %606 = vmatpush.bf16.msra.mxu0 %v434
    %607 = vmatpush.bf16.msra.mxu0 %v426
    %608 = vmatpush.bf16.msra.mxu0 %v418
    %609 = vmatpush.bf16.msra.mxu0 %v410
    %610 = vmatpush.bf16.msra.mxu0 %v402
    %611 = vmatpush.bf16.msra.mxu0 %v394
    %612 = vmatpush.bf16.msra.mxu0 %v386
    %613 = vmatmul.bf16.gmra.mxu0 %v185
    %v614 = vpop.f32.mrf.mxu0
    %v615 = vadd.f32 %v172, %v614
    %v616 = vpop.f32.mrf.mxu0
    %v617 = vadd.f32 %v172, %v616
    %618 = vdwg.mxu0
    %v619 = vpack.c.bf16 %v519, %v517
    %v620 = vpack.c.bf16 %v533, %v531
    %v621 = vpack.c.bf16 %v547, %v545
    %v622 = vpack.c.bf16 %v561, %v559
    %v623 = vpack.c.bf16 %v575, %v573
    %v624 = vpack.c.bf16 %v589, %v587
    %v625 = vpack.c.bf16 %v603, %v601
    %v626 = vpack.c.bf16 %v617, %v615
    %v627 = vld [vmem:[#allocation7] sm:$0xff]
    %v628 = vld [vmem:[#allocation7 + $0x8] sm:$0xff]
    %v629 = vld [vmem:[#allocation7 + $0x10] sm:$0xff]
    %v630 = vld [vmem:[#allocation7 + $0x18] sm:$0xff]
    %v631 = vld [vmem:[#allocation7 + $0x20] sm:$0xff]
    %v632 = vld [vmem:[#allocation7 + $0x28] sm:$0xff]
    %v633 = vld [vmem:[#allocation7 + $0x30] sm:$0xff]
    %v634 = vld [vmem:[#allocation7 + $0x38] sm:$0xff]
    %v635 = vld [vmem:[#allocation7 + $0x40] sm:$0xff]
    %v636 = vld [vmem:[#allocation7 + $0x48] sm:$0xff]
    %v637 = vld [vmem:[#allocation7 + $0x50] sm:$0xff]
    %v638 = vld [vmem:[#allocation7 + $0x58] sm:$0xff]
    %v639 = vld [vmem:[#allocation7 + $0x60] sm:$0xff]
    %v640 = vld [vmem:[#allocation7 + $0x68] sm:$0xff]
    %v641 = vld [vmem:[#allocation7 + $0x70] sm:$0xff]
    %v642 = vld [vmem:[#allocation7 + $0x78] sm:$0xff]
    %v643 = vld [vmem:[#allocation7 + $0x80] sm:$0xff]
    %v644 = vld [vmem:[#allocation7 + $0x88] sm:$0xff]
    %v645 = vld [vmem:[#allocation7 + $0x90] sm:$0xff]
    %v646 = vld [vmem:[#allocation7 + $0x98] sm:$0xff]
    %v647 = vld [vmem:[#allocation7 + $0xa0] sm:$0xff]
    %v648 = vld [vmem:[#allocation7 + $0xa8] sm:$0xff]
    %v649 = vld [vmem:[#allocation7 + $0xb0] sm:$0xff]
    %v650 = vld [vmem:[#allocation7 + $0xb8] sm:$0xff]
    %v651 = vld [vmem:[#allocation7 + $0xc0] sm:$0xff]
    %v652 = vld [vmem:[#allocation7 + $0xc8] sm:$0xff]
    %v653 = vld [vmem:[#allocation7 + $0xd0] sm:$0xff]
    %v654 = vld [vmem:[#allocation7 + $0xd8] sm:$0xff]
    %v655 = vld [vmem:[#allocation7 + $0xe0] sm:$0xff]
    %v656 = vld [vmem:[#allocation7 + $0xe8] sm:$0xff]
    %v657 = vld [vmem:[#allocation7 + $0xf0] sm:$0xff]
    %v658 = vld [vmem:[#allocation7 + $0xf8] sm:$0xff]
    %v659 = vld [vmem:[#allocation7 + $0x100] sm:$0xff]
    %v660 = vld [vmem:[#allocation7 + $0x108] sm:$0xff]
    %v661 = vld [vmem:[#allocation7 + $0x110] sm:$0xff]
    %v662 = vld [vmem:[#allocation7 + $0x118] sm:$0xff]
    %v663 = vld [vmem:[#allocation7 + $0x120] sm:$0xff]
    %v664 = vld [vmem:[#allocation7 + $0x128] sm:$0xff]
    %v665 = vld [vmem:[#allocation7 + $0x130] sm:$0xff]
    %v666 = vld [vmem:[#allocation7 + $0x138] sm:$0xff]
    %v667 = vld [vmem:[#allocation7 + $0x140] sm:$0xff]
    %v668 = vld [vmem:[#allocation7 + $0x148] sm:$0xff]
    %v669 = vld [vmem:[#allocation7 + $0x150] sm:$0xff]
    %v670 = vld [vmem:[#allocation7 + $0x158] sm:$0xff]
    %v671 = vld [vmem:[#allocation7 + $0x160] sm:$0xff]
    %v672 = vld [vmem:[#allocation7 + $0x168] sm:$0xff]
    %v673 = vld [vmem:[#allocation7 + $0x170] sm:$0xff]
    %v674 = vld [vmem:[#allocation7 + $0x178] sm:$0xff]
    %v675 = vld [vmem:[#allocation7 + $0x180] sm:$0xff]
    %v676 = vld [vmem:[#allocation7 + $0x188] sm:$0xff]
    %v677 = vld [vmem:[#allocation7 + $0x190] sm:$0xff]
    %v678 = vld [vmem:[#allocation7 + $0x198] sm:$0xff]
    %v679 = vld [vmem:[#allocation7 + $0x1a0] sm:$0xff]
    %v680 = vld [vmem:[#allocation7 + $0x1a8] sm:$0xff]
    %v681 = vld [vmem:[#allocation7 + $0x1b0] sm:$0xff]
    %v682 = vld [vmem:[#allocation7 + $0x1b8] sm:$0xff]
    %v683 = vld [vmem:[#allocation7 + $0x1c0] sm:$0xff]
    %v684 = vld [vmem:[#allocation7 + $0x1c8] sm:$0xff]
    %v685 = vld [vmem:[#allocation7 + $0x1d0] sm:$0xff]
    %v686 = vld [vmem:[#allocation7 + $0x1d8] sm:$0xff]
    %v687 = vld [vmem:[#allocation7 + $0x1e0] sm:$0xff]
    %v688 = vld [vmem:[#allocation7 + $0x1e8] sm:$0xff]
    %v689 = vld [vmem:[#allocation7 + $0x1f0] sm:$0xff]
    %v690 = vld [vmem:[#allocation7 + $0x1f8] sm:$0xff]
    %v691 = vld [vmem:[#allocation7 + $0x200] sm:$0xff]
    %v692 = vld [vmem:[#allocation7 + $0x208] sm:$0xff]
    %v693 = vld [vmem:[#allocation7 + $0x210] sm:$0xff]
    %v694 = vld [vmem:[#allocation7 + $0x218] sm:$0xff]
    %v695 = vld [vmem:[#allocation7 + $0x220] sm:$0xff]
    %v696 = vld [vmem:[#allocation7 + $0x228] sm:$0xff]
    %v697 = vld [vmem:[#allocation7 + $0x230] sm:$0xff]
    %v698 = vld [vmem:[#allocation7 + $0x238] sm:$0xff]
    %v699 = vld [vmem:[#allocation7 + $0x240] sm:$0xff]
    %v700 = vld [vmem:[#allocation7 + $0x248] sm:$0xff]
    %v701 = vld [vmem:[#allocation7 + $0x250] sm:$0xff]
    %v702 = vld [vmem:[#allocation7 + $0x258] sm:$0xff]
    %v703 = vld [vmem:[#allocation7 + $0x260] sm:$0xff]
    %v704 = vld [vmem:[#allocation7 + $0x268] sm:$0xff]
    %v705 = vld [vmem:[#allocation7 + $0x270] sm:$0xff]
    %v706 = vld [vmem:[#allocation7 + $0x278] sm:$0xff]
    %v707 = vld [vmem:[#allocation7 + $0x280] sm:$0xff]
    %v708 = vld [vmem:[#allocation7 + $0x288] sm:$0xff]
    %v709 = vld [vmem:[#allocation7 + $0x290] sm:$0xff]
    %v710 = vld [vmem:[#allocation7 + $0x298] sm:$0xff]
    %v711 = vld [vmem:[#allocation7 + $0x2a0] sm:$0xff]
    %v712 = vld [vmem:[#allocation7 + $0x2a8] sm:$0xff]
    %v713 = vld [vmem:[#allocation7 + $0x2b0] sm:$0xff]
    %v714 = vld [vmem:[#allocation7 + $0x2b8] sm:$0xff]
    %v715 = vld [vmem:[#allocation7 + $0x2c0] sm:$0xff]
    %v716 = vld [vmem:[#allocation7 + $0x2c8] sm:$0xff]
    %v717 = vld [vmem:[#allocation7 + $0x2d0] sm:$0xff]
    %v718 = vld [vmem:[#allocation7 + $0x2d8] sm:$0xff]
    %v719 = vld [vmem:[#allocation7 + $0x2e0] sm:$0xff]
    %v720 = vld [vmem:[#allocation7 + $0x2e8] sm:$0xff]
    %v721 = vld [vmem:[#allocation7 + $0x2f0] sm:$0xff]
    %v722 = vld [vmem:[#allocation7 + $0x2f8] sm:$0xff]
    %v723 = vld [vmem:[#allocation7 + $0x300] sm:$0xff]
    %v724 = vld [vmem:[#allocation7 + $0x308] sm:$0xff]
    %v725 = vld [vmem:[#allocation7 + $0x310] sm:$0xff]
    %v726 = vld [vmem:[#allocation7 + $0x318] sm:$0xff]
    %v727 = vld [vmem:[#allocation7 + $0x320] sm:$0xff]
    %v728 = vld [vmem:[#allocation7 + $0x328] sm:$0xff]
    %v729 = vld [vmem:[#allocation7 + $0x330] sm:$0xff]
    %v730 = vld [vmem:[#allocation7 + $0x338] sm:$0xff]
    %v731 = vld [vmem:[#allocation7 + $0x340] sm:$0xff]
    %v732 = vld [vmem:[#allocation7 + $0x348] sm:$0xff]
    %v733 = vld [vmem:[#allocation7 + $0x350] sm:$0xff]
    %v734 = vld [vmem:[#allocation7 + $0x358] sm:$0xff]
    %v735 = vld [vmem:[#allocation7 + $0x360] sm:$0xff]
    %v736 = vld [vmem:[#allocation7 + $0x368] sm:$0xff]
    %v737 = vld [vmem:[#allocation7 + $0x370] sm:$0xff]
    %v738 = vld [vmem:[#allocation7 + $0x378] sm:$0xff]
    %v739 = vld [vmem:[#allocation7 + $0x380] sm:$0xff]
    %v740 = vld [vmem:[#allocation7 + $0x388] sm:$0xff]
    %v741 = vld [vmem:[#allocation7 + $0x390] sm:$0xff]
    %v742 = vld [vmem:[#allocation7 + $0x398] sm:$0xff]
    %v743 = vld [vmem:[#allocation7 + $0x3a0] sm:$0xff]
    %v744 = vld [vmem:[#allocation7 + $0x3a8] sm:$0xff]
    %v745 = vld [vmem:[#allocation7 + $0x3b0] sm:$0xff]
    %v746 = vld [vmem:[#allocation7 + $0x3b8] sm:$0xff]
    %v747 = vld [vmem:[#allocation7 + $0x3c0] sm:$0xff]
    %v748 = vld [vmem:[#allocation7 + $0x3c8] sm:$0xff]
    %v749 = vld [vmem:[#allocation7 + $0x3d0] sm:$0xff]
    %v750 = vld [vmem:[#allocation7 + $0x3d8] sm:$0xff]
    %v751 = vld [vmem:[#allocation7 + $0x3e0] sm:$0xff]
    %v752 = vld [vmem:[#allocation7 + $0x3e8] sm:$0xff]
    %v753 = vld [vmem:[#allocation7 + $0x3f0] sm:$0xff]
    %v754 = vld [vmem:[#allocation7 + $0x3f8] sm:$0xff]
    %v755 = vld [vmem:[#allocation10 + $0x8] sm:$0x3]
    %v757 = vperm.slane %v755, 0
    %v758 = vperm.slane %v755, 1
    %v889 = vunpack.c.l.b16 %v627
    %v890 = vunpack.c.h.b16 %v627
    %v891 = vunpack.c.l.b16 %v628
    %v892 = vunpack.c.h.b16 %v628
    %v893 = vunpack.c.l.b16 %v629
    %v894 = vunpack.c.h.b16 %v629
    %v895 = vunpack.c.l.b16 %v630
    %v896 = vunpack.c.h.b16 %v630
    %v897 = vunpack.c.l.b16 %v631
    %v898 = vunpack.c.h.b16 %v631
    %v899 = vunpack.c.l.b16 %v632
    %v900 = vunpack.c.h.b16 %v632
    %v901 = vunpack.c.l.b16 %v633
    %v902 = vunpack.c.h.b16 %v633
    %v903 = vunpack.c.l.b16 %v634
    %v904 = vunpack.c.h.b16 %v634
    %v905 = vunpack.c.l.b16 %v635
    %v906 = vunpack.c.h.b16 %v635
    %v907 = vunpack.c.l.b16 %v636
    %v908 = vunpack.c.h.b16 %v636
    %v909 = vunpack.c.l.b16 %v637
    %v910 = vunpack.c.h.b16 %v637
    %v911 = vunpack.c.l.b16 %v638
    %v912 = vunpack.c.h.b16 %v638
    %v913 = vunpack.c.l.b16 %v639
    %v914 = vunpack.c.h.b16 %v639
    %v915 = vunpack.c.l.b16 %v640
    %v916 = vunpack.c.h.b16 %v640
    %v917 = vunpack.c.l.b16 %v641
    %v918 = vunpack.c.h.b16 %v641
    %v919 = vunpack.c.l.b16 %v642
    %v920 = vunpack.c.h.b16 %v642
    %v921 = vunpack.c.l.b16 %v643
    %v922 = vunpack.c.h.b16 %v643
    %v923 = vunpack.c.l.b16 %v644
    %v924 = vunpack.c.h.b16 %v644
    %v925 = vunpack.c.l.b16 %v645
    %v926 = vunpack.c.h.b16 %v645
    %v927 = vunpack.c.l.b16 %v646
    %v928 = vunpack.c.h.b16 %v646
    %v929 = vunpack.c.l.b16 %v647
    %v930 = vunpack.c.h.b16 %v647
    %v931 = vunpack.c.l.b16 %v648
    %v932 = vunpack.c.h.b16 %v648
    %v933 = vunpack.c.l.b16 %v649
    %v934 = vunpack.c.h.b16 %v649
    %v935 = vunpack.c.l.b16 %v650
    %v936 = vunpack.c.h.b16 %v650
    %v937 = vunpack.c.l.b16 %v651
    %v938 = vunpack.c.h.b16 %v651
    %v939 = vunpack.c.l.b16 %v652
    %v940 = vunpack.c.h.b16 %v652
    %v941 = vunpack.c.l.b16 %v653
    %v942 = vunpack.c.h.b16 %v653
    %v943 = vunpack.c.l.b16 %v654
    %v944 = vunpack.c.h.b16 %v654
    %v945 = vunpack.c.l.b16 %v655
    %v946 = vunpack.c.h.b16 %v655
    %v947 = vunpack.c.l.b16 %v656
    %v948 = vunpack.c.h.b16 %v656
    %v949 = vunpack.c.l.b16 %v657
    %v950 = vunpack.c.h.b16 %v657
    %v951 = vunpack.c.l.b16 %v658
    %v952 = vunpack.c.h.b16 %v658
    %v953 = vunpack.c.l.b16 %v659
    %v954 = vunpack.c.h.b16 %v659
    %v955 = vunpack.c.l.b16 %v660
    %v956 = vunpack.c.h.b16 %v660
    %v957 = vunpack.c.l.b16 %v661
    %v958 = vunpack.c.h.b16 %v661
    %v959 = vunpack.c.l.b16 %v662
    %v960 = vunpack.c.h.b16 %v662
    %v961 = vunpack.c.l.b16 %v663
    %v962 = vunpack.c.h.b16 %v663
    %v963 = vunpack.c.l.b16 %v664
    %v964 = vunpack.c.h.b16 %v664
    %v965 = vunpack.c.l.b16 %v665
    %v966 = vunpack.c.h.b16 %v665
    %v967 = vunpack.c.l.b16 %v666
    %v968 = vunpack.c.h.b16 %v666
    %v969 = vunpack.c.l.b16 %v667
    %v970 = vunpack.c.h.b16 %v667
    %v971 = vunpack.c.l.b16 %v668
    %v972 = vunpack.c.h.b16 %v668
    %v973 = vunpack.c.l.b16 %v669
    %v974 = vunpack.c.h.b16 %v669
    %v975 = vunpack.c.l.b16 %v670
    %v976 = vunpack.c.h.b16 %v670
    %v977 = vunpack.c.l.b16 %v671
    %v978 = vunpack.c.h.b16 %v671
    %v979 = vunpack.c.l.b16 %v672
    %v980 = vunpack.c.h.b16 %v672
    %v981 = vunpack.c.l.b16 %v673
    %v982 = vunpack.c.h.b16 %v673
    %v983 = vunpack.c.l.b16 %v674
    %v984 = vunpack.c.h.b16 %v674
    %v985 = vunpack.c.l.b16 %v675
    %v986 = vunpack.c.h.b16 %v675
    %v987 = vunpack.c.l.b16 %v676
    %v988 = vunpack.c.h.b16 %v676
    %v989 = vunpack.c.l.b16 %v677
    %v990 = vunpack.c.h.b16 %v677
    %v991 = vunpack.c.l.b16 %v678
    %v992 = vunpack.c.h.b16 %v678
    %v993 = vunpack.c.l.b16 %v679
    %v994 = vunpack.c.h.b16 %v679
    %v995 = vunpack.c.l.b16 %v680
    %v996 = vunpack.c.h.b16 %v680
    %v997 = vunpack.c.l.b16 %v681
    %v998 = vunpack.c.h.b16 %v681
    %v999 = vunpack.c.l.b16 %v682
    %v1000 = vunpack.c.h.b16 %v682
    %v1001 = vunpack.c.l.b16 %v683
    %v1002 = vunpack.c.h.b16 %v683
    %v1003 = vunpack.c.l.b16 %v684
    %v1004 = vunpack.c.h.b16 %v684
    %v1005 = vunpack.c.l.b16 %v685
    %v1006 = vunpack.c.h.b16 %v685
    %v1007 = vunpack.c.l.b16 %v686
    %v1008 = vunpack.c.h.b16 %v686
    %v1009 = vunpack.c.l.b16 %v687
    %v1010 = vunpack.c.h.b16 %v687
    %v1011 = vunpack.c.l.b16 %v688
    %v1012 = vunpack.c.h.b16 %v688
    %v1013 = vunpack.c.l.b16 %v689
    %v1014 = vunpack.c.h.b16 %v689
    %v1015 = vunpack.c.l.b16 %v690
    %v1016 = vunpack.c.h.b16 %v690
    %v1017 = vunpack.c.l.b16 %v691
    %v1018 = vunpack.c.h.b16 %v691
    %v1019 = vunpack.c.l.b16 %v692
    %v1020 = vunpack.c.h.b16 %v692
    %v1021 = vunpack.c.l.b16 %v693
    %v1022 = vunpack.c.h.b16 %v693
    %v1023 = vunpack.c.l.b16 %v694
    %v1024 = vunpack.c.h.b16 %v694
    %v1025 = vunpack.c.l.b16 %v695
    %v1026 = vunpack.c.h.b16 %v695
    %v1027 = vunpack.c.l.b16 %v696
    %v1028 = vunpack.c.h.b16 %v696
    %v1029 = vunpack.c.l.b16 %v697
    %v1030 = vunpack.c.h.b16 %v697
    %v1031 = vunpack.c.l.b16 %v698
    %v1032 = vunpack.c.h.b16 %v698
    %v1033 = vunpack.c.l.b16 %v699
    %v1034 = vunpack.c.h.b16 %v699
    %v1035 = vunpack.c.l.b16 %v700
    %v1036 = vunpack.c.h.b16 %v700
    %v1037 = vunpack.c.l.b16 %v701
    %v1038 = vunpack.c.h.b16 %v701
    %v1039 = vunpack.c.l.b16 %v702
    %v1040 = vunpack.c.h.b16 %v702
    %v1041 = vunpack.c.l.b16 %v703
    %v1042 = vunpack.c.h.b16 %v703
    %v1043 = vunpack.c.l.b16 %v704
    %v1044 = vunpack.c.h.b16 %v704
    %v1045 = vunpack.c.l.b16 %v705
    %v1046 = vunpack.c.h.b16 %v705
    %v1047 = vunpack.c.l.b16 %v706
    %v1048 = vunpack.c.h.b16 %v706
    %v1049 = vunpack.c.l.b16 %v707
    %v1050 = vunpack.c.h.b16 %v707
    %v1051 = vunpack.c.l.b16 %v708
    %v1052 = vunpack.c.h.b16 %v708
    %v1053 = vunpack.c.l.b16 %v709
    %v1054 = vunpack.c.h.b16 %v709
    %v1055 = vunpack.c.l.b16 %v710
    %v1056 = vunpack.c.h.b16 %v710
    %v1057 = vunpack.c.l.b16 %v711
    %v1058 = vunpack.c.h.b16 %v711
    %v1059 = vunpack.c.l.b16 %v712
    %v1060 = vunpack.c.h.b16 %v712
    %v1061 = vunpack.c.l.b16 %v713
    %v1062 = vunpack.c.h.b16 %v713
    %v1063 = vunpack.c.l.b16 %v714
    %v1064 = vunpack.c.h.b16 %v714
    %v1065 = vunpack.c.l.b16 %v715
    %v1066 = vunpack.c.h.b16 %v715
    %v1067 = vunpack.c.l.b16 %v716
    %v1068 = vunpack.c.h.b16 %v716
    %v1069 = vunpack.c.l.b16 %v717
    %v1070 = vunpack.c.h.b16 %v717
    %v1071 = vunpack.c.l.b16 %v718
    %v1072 = vunpack.c.h.b16 %v718
    %v1073 = vunpack.c.l.b16 %v719
    %v1074 = vunpack.c.h.b16 %v719
    %v1075 = vunpack.c.l.b16 %v720
    %v1076 = vunpack.c.h.b16 %v720
    %v1077 = vunpack.c.l.b16 %v721
    %v1078 = vunpack.c.h.b16 %v721
    %v1079 = vunpack.c.l.b16 %v722
    %v1080 = vunpack.c.h.b16 %v722
    %v1081 = vunpack.c.l.b16 %v723
    %v1082 = vunpack.c.h.b16 %v723
    %v1083 = vunpack.c.l.b16 %v724
    %v1084 = vunpack.c.h.b16 %v724
    %v1085 = vunpack.c.l.b16 %v725
    %v1086 = vunpack.c.h.b16 %v725
    %v1087 = vunpack.c.l.b16 %v726
    %v1088 = vunpack.c.h.b16 %v726
    %v1089 = vunpack.c.l.b16 %v727
    %v1090 = vunpack.c.h.b16 %v727
    %v1091 = vunpack.c.l.b16 %v728
    %v1092 = vunpack.c.h.b16 %v728
    %v1093 = vunpack.c.l.b16 %v729
    %v1094 = vunpack.c.h.b16 %v729
    %v1095 = vunpack.c.l.b16 %v730
    %v1096 = vunpack.c.h.b16 %v730
    %v1097 = vunpack.c.l.b16 %v731
    %v1098 = vunpack.c.h.b16 %v731
    %v1099 = vunpack.c.l.b16 %v732
    %v1100 = vunpack.c.h.b16 %v732
    %v1101 = vunpack.c.l.b16 %v733
    %v1102 = vunpack.c.h.b16 %v733
    %v1103 = vunpack.c.l.b16 %v734
    %v1104 = vunpack.c.h.b16 %v734
    %v1105 = vunpack.c.l.b16 %v735
    %v1106 = vunpack.c.h.b16 %v735
    %v1107 = vunpack.c.l.b16 %v736
    %v1108 = vunpack.c.h.b16 %v736
    %v1109 = vunpack.c.l.b16 %v737
    %v1110 = vunpack.c.h.b16 %v737
    %v1111 = vunpack.c.l.b16 %v738
    %v1112 = vunpack.c.h.b16 %v738
    %v1113 = vunpack.c.l.b16 %v739
    %v1114 = vunpack.c.h.b16 %v739
    %v1115 = vunpack.c.l.b16 %v740
    %v1116 = vunpack.c.h.b16 %v740
    %v1117 = vunpack.c.l.b16 %v741
    %v1118 = vunpack.c.h.b16 %v741
    %v1119 = vunpack.c.l.b16 %v742
    %v1120 = vunpack.c.h.b16 %v742
    %v1121 = vunpack.c.l.b16 %v743
    %v1122 = vunpack.c.h.b16 %v743
    %v1123 = vunpack.c.l.b16 %v744
    %v1124 = vunpack.c.h.b16 %v744
    %v1125 = vunpack.c.l.b16 %v745
    %v1126 = vunpack.c.h.b16 %v745
    %v1127 = vunpack.c.l.b16 %v746
    %v1128 = vunpack.c.h.b16 %v746
    %v1129 = vunpack.c.l.b16 %v747
    %v1130 = vunpack.c.h.b16 %v747
    %v1131 = vunpack.c.l.b16 %v748
    %v1132 = vunpack.c.h.b16 %v748
    %v1133 = vunpack.c.l.b16 %v749
    %v1134 = vunpack.c.h.b16 %v749
    %v1135 = vunpack.c.l.b16 %v750
    %v1136 = vunpack.c.h.b16 %v750
    %v1137 = vunpack.c.l.b16 %v751
    %v1138 = vunpack.c.h.b16 %v751
    %v1139 = vunpack.c.l.b16 %v752
    %v1140 = vunpack.c.h.b16 %v752
    %v1141 = vunpack.c.l.b16 %v753
    %v1142 = vunpack.c.h.b16 %v753
    %v1143 = vunpack.c.l.b16 %v754
    %v1144 = vunpack.c.h.b16 %v754
    %v1145 = vpack.c.b16 %v891, %v889
    %v1146 = vpack.c.b16 %v892, %v890
    %v1147 = vpack.c.b16 %v895, %v893
    %v1148 = vpack.c.b16 %v896, %v894
    %v1149 = vpack.c.b16 %v899, %v897
    %v1150 = vpack.c.b16 %v900, %v898
    %v1151 = vpack.c.b16 %v903, %v901
    %v1152 = vpack.c.b16 %v904, %v902
    %v1153 = vpack.c.b16 %v907, %v905
    %v1154 = vpack.c.b16 %v908, %v906
    %v1155 = vpack.c.b16 %v911, %v909
    %v1156 = vpack.c.b16 %v912, %v910
    %v1157 = vpack.c.b16 %v915, %v913
    %v1158 = vpack.c.b16 %v916, %v914
    %v1159 = vpack.c.b16 %v919, %v917
    %v1160 = vpack.c.b16 %v920, %v918
    %v1161 = vpack.c.b16 %v923, %v921
    %v1162 = vpack.c.b16 %v924, %v922
    %v1163 = vpack.c.b16 %v927, %v925
    %v1164 = vpack.c.b16 %v928, %v926
    %v1165 = vpack.c.b16 %v931, %v929
    %v1166 = vpack.c.b16 %v932, %v930
    %v1167 = vpack.c.b16 %v935, %v933
    %v1168 = vpack.c.b16 %v936, %v934
    %v1169 = vpack.c.b16 %v939, %v937
    %v1170 = vpack.c.b16 %v940, %v938
    %v1171 = vpack.c.b16 %v943, %v941
    %v1172 = vpack.c.b16 %v944, %v942
    %v1173 = vpack.c.b16 %v947, %v945
    %v1174 = vpack.c.b16 %v948, %v946
    %v1175 = vpack.c.b16 %v951, %v949
    %v1176 = vpack.c.b16 %v952, %v950
    %v1177 = vpack.c.b16 %v955, %v953
    %v1178 = vpack.c.b16 %v956, %v954
    %v1179 = vpack.c.b16 %v959, %v957
    %v1180 = vpack.c.b16 %v960, %v958
    %v1181 = vpack.c.b16 %v963, %v961
    %v1182 = vpack.c.b16 %v964, %v962
    %v1183 = vpack.c.b16 %v967, %v965
    %v1184 = vpack.c.b16 %v968, %v966
    %v1185 = vpack.c.b16 %v971, %v969
    %v1186 = vpack.c.b16 %v972, %v970
    %v1187 = vpack.c.b16 %v975, %v973
    %v1188 = vpack.c.b16 %v976, %v974
    %v1189 = vpack.c.b16 %v979, %v977
    %v1190 = vpack.c.b16 %v980, %v978
    %v1191 = vpack.c.b16 %v983, %v981
    %v1192 = vpack.c.b16 %v984, %v982
    %v1193 = vpack.c.b16 %v987, %v985
    %v1194 = vpack.c.b16 %v988, %v986
    %v1195 = vpack.c.b16 %v991, %v989
    %v1196 = vpack.c.b16 %v992, %v990
    %v1197 = vpack.c.b16 %v995, %v993
    %v1198 = vpack.c.b16 %v996, %v994
    %v1199 = vpack.c.b16 %v999, %v997
    %v1200 = vpack.c.b16 %v1000, %v998
    %v1201 = vpack.c.b16 %v1003, %v1001
    %v1202 = vpack.c.b16 %v1004, %v1002
    %v1203 = vpack.c.b16 %v1007, %v1005
    %v1204 = vpack.c.b16 %v1008, %v1006
    %v1205 = vpack.c.b16 %v1011, %v1009
    %v1206 = vpack.c.b16 %v1012, %v1010
    %v1207 = vpack.c.b16 %v1015, %v1013
    %v1208 = vpack.c.b16 %v1016, %v1014
    %v1209 = vpack.c.b16 %v1019, %v1017
    %v1210 = vpack.c.b16 %v1020, %v1018
    %v1211 = vpack.c.b16 %v1023, %v1021
    %v1212 = vpack.c.b16 %v1024, %v1022
    %v1213 = vpack.c.b16 %v1027, %v1025
    %v1214 = vpack.c.b16 %v1028, %v1026
    %v1215 = vpack.c.b16 %v1031, %v1029
    %v1216 = vpack.c.b16 %v1032, %v1030
    %v1217 = vpack.c.b16 %v1035, %v1033
    %v1218 = vpack.c.b16 %v1036, %v1034
    %v1219 = vpack.c.b16 %v1039, %v1037
    %v1220 = vpack.c.b16 %v1040, %v1038
    %v1221 = vpack.c.b16 %v1043, %v1041
    %v1222 = vpack.c.b16 %v1044, %v1042
    %v1223 = vpack.c.b16 %v1047, %v1045
    %v1224 = vpack.c.b16 %v1048, %v1046
    %v1225 = vpack.c.b16 %v1051, %v1049
    %v1226 = vpack.c.b16 %v1052, %v1050
    %v1227 = vpack.c.b16 %v1055, %v1053
    %v1228 = vpack.c.b16 %v1056, %v1054
    %v1229 = vpack.c.b16 %v1059, %v1057
    %v1230 = vpack.c.b16 %v1060, %v1058
    %v1231 = vpack.c.b16 %v1063, %v1061
    %v1232 = vpack.c.b16 %v1064, %v1062
    %v1233 = vpack.c.b16 %v1067, %v1065
    %v1234 = vpack.c.b16 %v1068, %v1066
    %v1235 = vpack.c.b16 %v1071, %v1069
    %v1236 = vpack.c.b16 %v1072, %v1070
    %v1237 = vpack.c.b16 %v1075, %v1073
    %v1238 = vpack.c.b16 %v1076, %v1074
    %v1239 = vpack.c.b16 %v1079, %v1077
    %v1240 = vpack.c.b16 %v1080, %v1078
    %v1241 = vpack.c.b16 %v1083, %v1081
    %v1242 = vpack.c.b16 %v1084, %v1082
    %v1243 = vpack.c.b16 %v1087, %v1085
    %v1244 = vpack.c.b16 %v1088, %v1086
    %v1245 = vpack.c.b16 %v1091, %v1089
    %v1246 = vpack.c.b16 %v1092, %v1090
    %v1247 = vpack.c.b16 %v1095, %v1093
    %v1248 = vpack.c.b16 %v1096, %v1094
    %v1249 = vpack.c.b16 %v1099, %v1097
    %v1250 = vpack.c.b16 %v1100, %v1098
    %v1251 = vpack.c.b16 %v1103, %v1101
    %v1252 = vpack.c.b16 %v1104, %v1102
    %v1253 = vpack.c.b16 %v1107, %v1105
    %v1254 = vpack.c.b16 %v1108, %v1106
    %v1255 = vpack.c.b16 %v1111, %v1109
    %v1256 = vpack.c.b16 %v1112, %v1110
    %v1257 = vpack.c.b16 %v1115, %v1113
    %v1258 = vpack.c.b16 %v1116, %v1114
    %v1259 = vpack.c.b16 %v1119, %v1117
    %v1260 = vpack.c.b16 %v1120, %v1118
    %v1261 = vpack.c.b16 %v1123, %v1121
    %v1262 = vpack.c.b16 %v1124, %v1122
    %v1263 = vpack.c.b16 %v1127, %v1125
    %v1264 = vpack.c.b16 %v1128, %v1126
    %v1265 = vpack.c.b16 %v1131, %v1129
    %v1266 = vpack.c.b16 %v1132, %v1130
    %v1267 = vpack.c.b16 %v1135, %v1133
    %v1268 = vpack.c.b16 %v1136, %v1134
    %v1269 = vpack.c.b16 %v1139, %v1137
    %v1270 = vpack.c.b16 %v1140, %v1138
    %v1271 = vpack.c.b16 %v1143, %v1141
    %v1272 = vpack.c.b16 %v1144, %v1142
    %1401 = vmatpush.bf16.msra.mxu0 %v1159
    %1402 = vmatpush.bf16.msra.mxu0 %v1157
    %1403 = vmatpush.bf16.msra.mxu0 %v1155
    %1404 = vmatpush.bf16.msra.mxu0 %v1153
    %1405 = vmatpush.bf16.msra.mxu0 %v1151
    %1406 = vmatpush.bf16.msra.mxu0 %v1149
    %1407 = vmatpush.bf16.msra.mxu0 %v1147
    %1408 = vmatpush.bf16.msra.mxu0 %v1145
    %1409 = vmatmul.bf16.gmra.mxu0 %v619
    %v1410 = vpop.f32.mrf.mxu0
    %v1411 = vadd.f32 %v757, %v1410
    %v1412 = vpop.f32.mrf.mxu0
    %v1413 = vadd.f32 %v757, %v1412
    %1414 = vdwg.mxu0
    %1415 = vmatpush.bf16.msra.mxu0 %v1175
    %1416 = vmatpush.bf16.msra.mxu0 %v1173
    %1417 = vmatpush.bf16.msra.mxu0 %v1171
    %1418 = vmatpush.bf16.msra.mxu0 %v1169
    %1419 = vmatpush.bf16.msra.mxu0 %v1167
    %1420 = vmatpush.bf16.msra.mxu0 %v1165
    %1421 = vmatpush.bf16.msra.mxu0 %v1163
    %1422 = vmatpush.bf16.msra.mxu0 %v1161
    %1423 = vmatmul.bf16.gmra.mxu0 %v620
    %v1424 = vpop.f32.mrf.mxu0
    %v1425 = vadd.f32 %v1411, %v1424
    %v1426 = vpop.f32.mrf.mxu0
    %v1427 = vadd.f32 %v1413, %v1426
    %1428 = vdwg.mxu0
    %1429 = vmatpush.bf16.msra.mxu0 %v1191
    %1430 = vmatpush.bf16.msra.mxu0 %v1189
    %1431 = vmatpush.bf16.msra.mxu0 %v1187
    %1432 = vmatpush.bf16.msra.mxu0 %v1185
    %1433 = vmatpush.bf16.msra.mxu0 %v1183
    %1434 = vmatpush.bf16.msra.mxu0 %v1181
    %1435 = vmatpush.bf16.msra.mxu0 %v1179
    %1436 = vmatpush.bf16.msra.mxu0 %v1177
    %1437 = vmatmul.bf16.gmra.mxu0 %v621
    %v1438 = vpop.f32.mrf.mxu0
    %v1439 = vadd.f32 %v1425, %v1438
    %v1440 = vpop.f32.mrf.mxu0
    %v1441 = vadd.f32 %v1427, %v1440
    %1442 = vdwg.mxu0
    %1443 = vmatpush.bf16.msra.mxu0 %v1207
    %1444 = vmatpush.bf16.msra.mxu0 %v1205
    %1445 = vmatpush.bf16.msra.mxu0 %v1203
    %1446 = vmatpush.bf16.msra.mxu0 %v1201
    %1447 = vmatpush.bf16.msra.mxu0 %v1199
    %1448 = vmatpush.bf16.msra.mxu0 %v1197
    %1449 = vmatpush.bf16.msra.mxu0 %v1195
    %1450 = vmatpush.bf16.msra.mxu0 %v1193
    %1451 = vmatmul.bf16.gmra.mxu0 %v622
    %v1452 = vpop.f32.mrf.mxu0
    %v1453 = vadd.f32 %v1439, %v1452
    %v1454 = vpop.f32.mrf.mxu0
    %v1455 = vadd.f32 %v1441, %v1454
    %1456 = vdwg.mxu0
    %1457 = vmatpush.bf16.msra.mxu0 %v1223
    %1458 = vmatpush.bf16.msra.mxu0 %v1221
    %1459 = vmatpush.bf16.msra.mxu0 %v1219
    %1460 = vmatpush.bf16.msra.mxu0 %v1217
    %1461 = vmatpush.bf16.msra.mxu0 %v1215
    %1462 = vmatpush.bf16.msra.mxu0 %v1213
    %1463 = vmatpush.bf16.msra.mxu0 %v1211
    %1464 = vmatpush.bf16.msra.mxu0 %v1209
    %1465 = vmatmul.bf16.gmra.mxu0 %v623
    %v1466 = vpop.f32.mrf.mxu0
    %v1467 = vadd.f32 %v1453, %v1466
    %v1468 = vpop.f32.mrf.mxu0
    %v1469 = vadd.f32 %v1455, %v1468
    %1470 = vdwg.mxu0
    %1471 = vmatpush.bf16.msra.mxu0 %v1239
    %1472 = vmatpush.bf16.msra.mxu0 %v1237
    %1473 = vmatpush.bf16.msra.mxu0 %v1235
    %1474 = vmatpush.bf16.msra.mxu0 %v1233
    %1475 = vmatpush.bf16.msra.mxu0 %v1231
    %1476 = vmatpush.bf16.msra.mxu0 %v1229
    %1477 = vmatpush.bf16.msra.mxu0 %v1227
    %1478 = vmatpush.bf16.msra.mxu0 %v1225
    %1479 = vmatmul.bf16.gmra.mxu0 %v624
    %v1480 = vpop.f32.mrf.mxu0
    %v1481 = vadd.f32 %v1467, %v1480
    %v1482 = vpop.f32.mrf.mxu0
    %v1483 = vadd.f32 %v1469, %v1482
    %1484 = vdwg.mxu0
    %1485 = vmatpush.bf16.msra.mxu0 %v1255
    %1486 = vmatpush.bf16.msra.mxu0 %v1253
    %1487 = vmatpush.bf16.msra.mxu0 %v1251
    %1488 = vmatpush.bf16.msra.mxu0 %v1249
    %1489 = vmatpush.bf16.msra.mxu0 %v1247
    %1490 = vmatpush.bf16.msra.mxu0 %v1245
    %1491 = vmatpush.bf16.msra.mxu0 %v1243
    %1492 = vmatpush.bf16.msra.mxu0 %v1241
    %1493 = vmatmul.bf16.gmra.mxu0 %v625
    %v1494 = vpop.f32.mrf.mxu0
    %v1495 = vadd.f32 %v1481, %v1494
    %v1496 = vpop.f32.mrf.mxu0
    %v1497 = vadd.f32 %v1483, %v1496
    %1498 = vdwg.mxu0
    %1499 = vmatpush.bf16.msra.mxu0 %v1271
    %1500 = vmatpush.bf16.msra.mxu0 %v1269
    %1501 = vmatpush.bf16.msra.mxu0 %v1267
    %1502 = vmatpush.bf16.msra.mxu0 %v1265
    %1503 = vmatpush.bf16.msra.mxu0 %v1263
    %1504 = vmatpush.bf16.msra.mxu0 %v1261
    %1505 = vmatpush.bf16.msra.mxu0 %v1259
    %1506 = vmatpush.bf16.msra.mxu0 %v1257
    %1507 = vmatmul.bf16.gmra.mxu0 %v626
    %v1508 = vpop.f32.mrf.mxu0
    %v1509 = vadd.f32 %v1495, %v1508
    %v1510 = vpop.f32.mrf.mxu0
    %v1511 = vadd.f32 %v1497, %v1510
    %1512 = vdwg.mxu0
    %1513 = vmatpush.bf16.msra.mxu0 %v1160
    %1514 = vmatpush.bf16.msra.mxu0 %v1158
    %1515 = vmatpush.bf16.msra.mxu0 %v1156
    %1516 = vmatpush.bf16.msra.mxu0 %v1154
    %1517 = vmatpush.bf16.msra.mxu0 %v1152
    %1518 = vmatpush.bf16.msra.mxu0 %v1150
    %1519 = vmatpush.bf16.msra.mxu0 %v1148
    %1520 = vmatpush.bf16.msra.mxu0 %v1146
    %1521 = vmatmul.bf16.gmra.mxu0 %v619
    %v1522 = vpop.f32.mrf.mxu0
    %v1523 = vadd.f32 %v758, %v1522
    %v1524 = vpop.f32.mrf.mxu0
    %v1525 = vadd.f32 %v758, %v1524
    %1526 = vdwg.mxu0
    %1527 = vmatpush.bf16.msra.mxu0 %v1176
    %1528 = vmatpush.bf16.msra.mxu0 %v1174
    %1529 = vmatpush.bf16.msra.mxu0 %v1172
    %1530 = vmatpush.bf16.msra.mxu0 %v1170
    %1531 = vmatpush.bf16.msra.mxu0 %v1168
    %1532 = vmatpush.bf16.msra.mxu0 %v1166
    %1533 = vmatpush.bf16.msra.mxu0 %v1164
    %1534 = vmatpush.bf16.msra.mxu0 %v1162
    %1535 = vmatmul.bf16.gmra.mxu0 %v620
    %v1536 = vpop.f32.mrf.mxu0
    %v1537 = vadd.f32 %v1523, %v1536
    %v1538 = vpop.f32.mrf.mxu0
    %v1539 = vadd.f32 %v1525, %v1538
    %1540 = vdwg.mxu0
    %1541 = vmatpush.bf16.msra.mxu0 %v1192
    %1542 = vmatpush.bf16.msra.mxu0 %v1190
    %1543 = vmatpush.bf16.msra.mxu0 %v1188
    %1544 = vmatpush.bf16.msra.mxu0 %v1186
    %1545 = vmatpush.bf16.msra.mxu0 %v1184
    %1546 = vmatpush.bf16.msra.mxu0 %v1182
    %1547 = vmatpush.bf16.msra.mxu0 %v1180
    %1548 = vmatpush.bf16.msra.mxu0 %v1178
    %1549 = vmatmul.bf16.gmra.mxu0 %v621
    %v1550 = vpop.f32.mrf.mxu0
    %v1551 = vadd.f32 %v1537, %v1550
    %v1552 = vpop.f32.mrf.mxu0
    %v1553 = vadd.f32 %v1539, %v1552
    %1554 = vdwg.mxu0
    %1555 = vmatpush.bf16.msra.mxu0 %v1208
    %1556 = vmatpush.bf16.msra.mxu0 %v1206
    %1557 = vmatpush.bf16.msra.mxu0 %v1204
    %1558 = vmatpush.bf16.msra.mxu0 %v1202
    %1559 = vmatpush.bf16.msra.mxu0 %v1200
    %1560 = vmatpush.bf16.msra.mxu0 %v1198
    %1561 = vmatpush.bf16.msra.mxu0 %v1196
    %1562 = vmatpush.bf16.msra.mxu0 %v1194
    %1563 = vmatmul.bf16.gmra.mxu0 %v622
    %v1564 = vpop.f32.mrf.mxu0
    %v1565 = vadd.f32 %v1551, %v1564
    %v1566 = vpop.f32.mrf.mxu0
    %v1567 = vadd.f32 %v1553, %v1566
    %1568 = vdwg.mxu0
    %1569 = vmatpush.bf16.msra.mxu0 %v1224
    %1570 = vmatpush.bf16.msra.mxu0 %v1222
    %1571 = vmatpush.bf16.msra.mxu0 %v1220
    %1572 = vmatpush.bf16.msra.mxu0 %v1218
    %1573 = vmatpush.bf16.msra.mxu0 %v1216
    %1574 = vmatpush.bf16.msra.mxu0 %v1214
    %1575 = vmatpush.bf16.msra.mxu0 %v1212
    %1576 = vmatpush.bf16.msra.mxu0 %v1210
    %1577 = vmatmul.bf16.gmra.mxu0 %v623
    %v1578 = vpop.f32.mrf.mxu0
    %v1579 = vadd.f32 %v1565, %v1578
    %v1580 = vpop.f32.mrf.mxu0
    %v1581 = vadd.f32 %v1567, %v1580
    %1582 = vdwg.mxu0
    %1583 = vmatpush.bf16.msra.mxu0 %v1240
    %1584 = vmatpush.bf16.msra.mxu0 %v1238
    %1585 = vmatpush.bf16.msra.mxu0 %v1236
    %1586 = vmatpush.bf16.msra.mxu0 %v1234
    %1587 = vmatpush.bf16.msra.mxu0 %v1232
    %1588 = vmatpush.bf16.msra.mxu0 %v1230
    %1589 = vmatpush.bf16.msra.mxu0 %v1228
    %1590 = vmatpush.bf16.msra.mxu0 %v1226
    %1591 = vmatmul.bf16.gmra.mxu0 %v624
    %v1592 = vpop.f32.mrf.mxu0
    %v1593 = vadd.f32 %v1579, %v1592
    %v1594 = vpop.f32.mrf.mxu0
    %v1595 = vadd.f32 %v1581, %v1594
    %1596 = vdwg.mxu0
    %1597 = vmatpush.bf16.msra.mxu0 %v1256
    %1598 = vmatpush.bf16.msra.mxu0 %v1254
    %1599 = vmatpush.bf16.msra.mxu0 %v1252
    %1600 = vmatpush.bf16.msra.mxu0 %v1250
    %1601 = vmatpush.bf16.msra.mxu0 %v1248
    %1602 = vmatpush.bf16.msra.mxu0 %v1246
    %1603 = vmatpush.bf16.msra.mxu0 %v1244
    %1604 = vmatpush.bf16.msra.mxu0 %v1242
    %1605 = vmatmul.bf16.gmra.mxu0 %v625
    %v1606 = vpop.f32.mrf.mxu0
    %v1607 = vadd.f32 %v1593, %v1606
    %v1608 = vpop.f32.mrf.mxu0
    %v1609 = vadd.f32 %v1595, %v1608
    %1610 = vdwg.mxu0
    %1611 = vmatpush.bf16.msra.mxu0 %v1272
    %1612 = vmatpush.bf16.msra.mxu0 %v1270
    %1613 = vmatpush.bf16.msra.mxu0 %v1268
    %1614 = vmatpush.bf16.msra.mxu0 %v1266
    %1615 = vmatpush.bf16.msra.mxu0 %v1264
    %1616 = vmatpush.bf16.msra.mxu0 %v1262
    %1617 = vmatpush.bf16.msra.mxu0 %v1260
    %1618 = vmatpush.bf16.msra.mxu0 %v1258
    %1619 = vmatmul.bf16.gmra.mxu0 %v626
    %v1620 = vpop.f32.mrf.mxu0
    %v1621 = vadd.f32 %v1607, %v1620
    %v1622 = vpop.f32.mrf.mxu0
    %v1623 = vadd.f32 %v1609, %v1622
    %1624 = vdwg.mxu0
    %v1625 = vpack.c.bf16 %v1511, %v1509
    %v1626 = vpack.c.bf16 %v1623, %v1621
    %v1627 = vld [vmem:[#allocation8] sm:$0xf]
    %v1628 = vld [vmem:[#allocation8 + $0x4] sm:$0xf]
    %v1629 = vld [vmem:[#allocation8 + $0x8] sm:$0xf]
    %v1630 = vld [vmem:[#allocation8 + $0xc] sm:$0xf]
    %v1631 = vld [vmem:[#allocation8 + $0x10] sm:$0xf]
    %v1632 = vld [vmem:[#allocation8 + $0x14] sm:$0xf]
    %v1633 = vld [vmem:[#allocation8 + $0x18] sm:$0xf]
    %v1634 = vld [vmem:[#allocation8 + $0x1c] sm:$0xf]
    %v1635 = vld [vmem:[#allocation8 + $0x20] sm:$0xf]
    %v1636 = vld [vmem:[#allocation8 + $0x24] sm:$0xf]
    %v1637 = vld [vmem:[#allocation8 + $0x28] sm:$0xf]
    %v1638 = vld [vmem:[#allocation8 + $0x2c] sm:$0xf]
    %v1639 = vld [vmem:[#allocation8 + $0x30] sm:$0xf]
    %v1640 = vld [vmem:[#allocation8 + $0x34] sm:$0xf]
    %v1641 = vld [vmem:[#allocation8 + $0x38] sm:$0xf]
    %v1642 = vld [vmem:[#allocation8 + $0x3c] sm:$0xf]
    %v1643 = vld [vmem:[#allocation8 + $0x40] sm:$0xf]
    %v1644 = vld [vmem:[#allocation8 + $0x44] sm:$0xf]
    %v1645 = vld [vmem:[#allocation8 + $0x48] sm:$0xf]
    %v1646 = vld [vmem:[#allocation8 + $0x4c] sm:$0xf]
    %v1647 = vld [vmem:[#allocation8 + $0x50] sm:$0xf]
    %v1648 = vld [vmem:[#allocation8 + $0x54] sm:$0xf]
    %v1649 = vld [vmem:[#allocation8 + $0x58] sm:$0xf]
    %v1650 = vld [vmem:[#allocation8 + $0x5c] sm:$0xf]
    %v1651 = vld [vmem:[#allocation8 + $0x60] sm:$0xf]
    %v1652 = vld [vmem:[#allocation8 + $0x64] sm:$0xf]
    %v1653 = vld [vmem:[#allocation8 + $0x68] sm:$0xf]
    %v1654 = vld [vmem:[#allocation8 + $0x6c] sm:$0xf]
    %v1655 = vld [vmem:[#allocation8 + $0x70] sm:$0xf]
    %v1656 = vld [vmem:[#allocation8 + $0x74] sm:$0xf]
    %v1657 = vld [vmem:[#allocation8 + $0x78] sm:$0xf]
    %v1658 = vld [vmem:[#allocation8 + $0x7c] sm:$0xf]
    %v1659 = vld [vmem:[#allocation10 + $0xa] sm:$0x1]
    %v1661 = vperm.slane %v1659, 0
    %v1695 = vunpack.c.l.b16 %v1627
    %v1696 = vunpack.c.l.b16 %v1628
    %v1697 = vunpack.c.l.b16 %v1629
    %v1698 = vunpack.c.l.b16 %v1630
    %v1699 = vunpack.c.l.b16 %v1631
    %v1700 = vunpack.c.l.b16 %v1632
    %v1701 = vunpack.c.l.b16 %v1633
    %v1702 = vunpack.c.l.b16 %v1634
    %v1703 = vunpack.c.l.b16 %v1635
    %v1704 = vunpack.c.l.b16 %v1636
    %v1705 = vunpack.c.l.b16 %v1637
    %v1706 = vunpack.c.l.b16 %v1638
    %v1707 = vunpack.c.l.b16 %v1639
    %v1708 = vunpack.c.l.b16 %v1640
    %v1709 = vunpack.c.l.b16 %v1641
    %v1710 = vunpack.c.l.b16 %v1642
    %v1711 = vunpack.c.l.b16 %v1643
    %v1712 = vunpack.c.l.b16 %v1644
    %v1713 = vunpack.c.l.b16 %v1645
    %v1714 = vunpack.c.l.b16 %v1646
    %v1715 = vunpack.c.l.b16 %v1647
    %v1716 = vunpack.c.l.b16 %v1648
    %v1717 = vunpack.c.l.b16 %v1649
    %v1718 = vunpack.c.l.b16 %v1650
    %v1719 = vunpack.c.l.b16 %v1651
    %v1720 = vunpack.c.l.b16 %v1652
    %v1721 = vunpack.c.l.b16 %v1653
    %v1722 = vunpack.c.l.b16 %v1654
    %v1723 = vunpack.c.l.b16 %v1655
    %v1724 = vunpack.c.l.b16 %v1656
    %v1725 = vunpack.c.l.b16 %v1657
    %v1726 = vunpack.c.l.b16 %v1658
    %v1727 = vpack.c.b16 %v1696, %v1695
    %v1728 = vpack.c.b16 %v1698, %v1697
    %v1729 = vpack.c.b16 %v1700, %v1699
    %v1730 = vpack.c.b16 %v1702, %v1701
    %v1731 = vpack.c.b16 %v1704, %v1703
    %v1732 = vpack.c.b16 %v1706, %v1705
    %v1733 = vpack.c.b16 %v1708, %v1707
    %v1734 = vpack.c.b16 %v1710, %v1709
    %v1735 = vpack.c.b16 %v1712, %v1711
    %v1736 = vpack.c.b16 %v1714, %v1713
    %v1737 = vpack.c.b16 %v1716, %v1715
    %v1738 = vpack.c.b16 %v1718, %v1717
    %v1739 = vpack.c.b16 %v1720, %v1719
    %v1740 = vpack.c.b16 %v1722, %v1721
    %v1741 = vpack.c.b16 %v1724, %v1723
    %v1742 = vpack.c.b16 %v1726, %v1725
    %1759 = vmatpush.bf16.msra.mxu0 %v1734
    %1760 = vmatpush.bf16.msra.mxu0 %v1733
    %1761 = vmatpush.bf16.msra.mxu0 %v1732
    %1762 = vmatpush.bf16.msra.mxu0 %v1731
    %1763 = vmatpush.bf16.msra.mxu0 %v1730
    %1764 = vmatpush.bf16.msra.mxu0 %v1729
    %1765 = vmatpush.bf16.msra.mxu0 %v1728
    %1766 = vmatpush.bf16.msra.mxu0 %v1727
    %1767 = vmatmul.bf16.gmra.mxu0 %v1625
    %v1768 = vpop.f32.mrf.mxu0
    %v1769 = vadd.f32 %v1661, %v1768
    %v1770 = vpop.f32.mrf.mxu0
    %v1771 = vadd.f32 %v1661, %v1770
    %1772 = vdwg.mxu0
    %1773 = vmatpush.bf16.msra.mxu0 %v1742
    %1774 = vmatpush.bf16.msra.mxu0 %v1741
    %1775 = vmatpush.bf16.msra.mxu0 %v1740
    %1776 = vmatpush.bf16.msra.mxu0 %v1739
    %1777 = vmatpush.bf16.msra.mxu0 %v1738
    %1778 = vmatpush.bf16.msra.mxu0 %v1737
    %1779 = vmatpush.bf16.msra.mxu0 %v1736
    %1780 = vmatpush.bf16.msra.mxu0 %v1735
    %1781 = vmatmul.bf16.gmra.mxu0 %v1626
    %v1782 = vpop.f32.mrf.mxu0
    %v1783 = vadd.f32 %v1769, %v1782
    %v1784 = vpop.f32.mrf.mxu0
    %v1785 = vadd.f32 %v1771, %v1784
    %1786 = vdwg.mxu0
    %1787 = vst [vmem:[#allocation11] sm:$0xff] %v1783
    %1788 = vst [vmem:[#allocation11 + $0x8] sm:$0xff] %v1785
    // Predicated region
    $region42: #{tpu_custom_call.1} parent=1 // pred_check
      _
    $region43: #{tpu_custom_call.1} parent=1 // pred_check_branch
      %1790 = sbr.rel (0) target = $region45
    $region44: #{tpu_custom_call.1} parent=1 // pred_region
      %1792 = vsyncadd [#allocation4], 0
      %s1793 = sshll.u32 [#allocation11], 4
      %s1794 = int_to_ptr.vmem [resolvable:$true] %s1793
      %s1795 = sshll.u32 %s5, 4
      %s1796 = int_to_ptr.hbm [resolvable:$true] %s1795
      %1801 = dma.vmem_to_hbm [thread:$0]  %s1794, 256, %s1796, [#allocation4], 128, 128, 8
    $region45: #{tpu_custom_call.1} parent=1 // pred_fallthru
      _
    // Predicated region
    $region46: #{tpu_custom_call.1} parent=1 // pred_check
      _
    $region47: #{tpu_custom_call.1} parent=1 // pred_check_branch
      %1803 = sbr.rel (0) target = $region49
    $region48: #{tpu_custom_call.1} parent=1 // pred_region
      %1805 = dma.done [#allocation4], 256
    $region49: #{tpu_custom_call.1} parent=1 // pred_fallthru
      _
    %1806 = vsyncpa [#allocation3], 1
    %1807 = vsyncpa [#allocation6], 1
    %1808 = vsyncpa [#allocation9], 1
    %1809 = vsyncpa [#allocation4], 1

</llo_original>
